<compile_context>
chip_gen: v7x
topology: tpu7x:2x2x1
jax: 0.10.0
libtpu: 0.0.40
codegen_flags: <defaults>
</compile_context>

<pallas_src>
import functools
import math

import jax
import jax.numpy as jnp
from jax.experimental import pallas as pl
from jax.experimental.pallas import tpu as pltpu

# Scoped-VMEM ceiling safe on every generation (v7x physical = 64 MiB).
VMEM_LIMIT_BYTES = 48 * 1024 * 1024


# ------------------------------ tile helpers --------------------------------

def _choose_tile(dim, target, align):
    """Largest tile <= target that divides `dim` and is a multiple of `align`;
    falls back to the full dimension (always legal in a BlockSpec)."""
    if dim <= target:
        return dim
    t = (target // align) * align
    while t >= align:
        if dim % t == 0:
            return t
        t -= align
    return dim


def gelu_new(x):
    # GPT-2 "gelu_new" (tanh approximation); computed in f32 inside kernels.
    return 0.5 * x * (1.0 + jnp.tanh(
        math.sqrt(2.0 / math.pi) * (x + 0.044715 * x * x * x)))


# ----------------------------- linear kernel --------------------------------

def _linear_kernel(*refs, packed, rhs_transposed, activation, has_bias,
                   has_residual, fuse_ln, ln_eps):
    """Tiled matmul with f32 accumulator; weights either packed-sign int32
    (unpacked in-kernel) or dense bf16; fused bias/gelu/residual/LayerNorm
    epilogue."""
    it = iter(refs)
    x_ref = next(it)
    w_ref = next(it)
    b_ref = next(it) if has_bias else None
    res_ref = next(it) if has_residual else None
    g_ref = next(it) if fuse_ln else None
    bt_ref = next(it) if fuse_ln else None
    o_ref = next(it)
    oln_ref = next(it) if fuse_ln else None
    acc_ref = next(it)

    k = pl.program_id(2)

    @pl.when(k == 0)
    def _():
        acc_ref[...] = jnp.zeros_like(acc_ref)

    x = x_ref[...]
    if packed:
        # int32 words: bit i of word [k32, n] is the sign bit of W[32*k32+i, n]
        # (1 -> +1, 0 -> -1).  Unpack rides in VPU slots while the MXU runs.
        p = w_ref[...]                                      # [tk//32, tn] int32
        tk32, tn = p.shape
        sh = jax.lax.broadcasted_iota(jnp.int32, (tk32, 32, tn), 1)
        bits = jax.lax.shift_right_logical(
            jnp.broadcast_to(p[:, None, :], (tk32, 32, tn)), sh) & 1
        w = jnp.where(bits == 1, 1.0, -1.0)                 # f32 +/-1
        w = w.reshape(tk32 * 32, tn).astype(x.dtype)        # trivial sublane merge
        acc_ref[...] += jnp.dot(x, w, preferred_element_type=jnp.float32)
    elif rhs_transposed:
        # w tile is [tn, tk]; contract on the shared K axis (no transpose copy).
        acc_ref[...] += jax.lax.dot_general(
            x, w_ref[...], (((1,), (1,)), ((), ())),
            preferred_element_type=jnp.float32)
    else:
        acc_ref[...] += jnp.dot(x, w_ref[...],
                                preferred_element_type=jnp.float32)

    @pl.when(k == pl.num_programs(2) - 1)
    def _():
        out = acc_ref[...]
        if has_bias:
            out = out + b_ref[...].astype(jnp.float32)
        if activation == "gelu":
            out = gelu_new(out)
        if has_residual:
            out = out + res_ref[...].astype(jnp.float32)
        o_ref[...] = out.astype(o_ref.dtype)
        if fuse_ln:
            # Fused LayerNorm of the residual stream (tn == full feature dim).
            mu = jnp.mean(out, axis=-1, keepdims=True)
            var = jnp.mean(jnp.square(out - mu), axis=-1, keepdims=True)
            y = (out - mu) * jax.lax.rsqrt(var + ln_eps)
            oln_ref[...] = (y * g_ref[...].astype(jnp.float32)
                            + bt_ref[...].astype(jnp.float32)).astype(oln_ref.dtype)


def fused_linear(x, w, b=None, *, residual=None, activation=None,
                 ln_g=None, ln_b=None, ln_eps=1e-5, packed=True,
                 rhs_transposed=False, out_dtype=jnp.bfloat16,
                 tm=512, tn=768, tk=1024):
    """y = x @ W (+b) (+gelu) (+residual), optionally also emitting LN(y).

    packed=True : w is int32 [K//32, N] packed sign weights.
    packed=False, rhs_transposed=True : w is dense [N, K] (tied lm_head)."""
    M, K = x.shape
    if packed:
        kw, N = w.shape
        assert kw * 32 == K, "packed weight must be [K//32, N] int32"
    elif rhs_transposed:
        N, kdim = w.shape
        assert kdim == K
    else:
        kdim, N = w.shape
        assert kdim == K

    fuse_ln = ln_g is not None
    tm = _choose_tile(M, tm, 8)
    # Fused LN needs the full feature row in one tile.
    tn = N if fuse_ln else _choose_tile(N, tn, 128)
    # packed path: tk//32 must stay sublane aligned -> 256 alignment (or full K).
    tk = _choose_tile(K, tk, 256 if packed else 128)
    grid = (M // tm, N // tn, K // tk)

    args = [x]
    in_specs = [pl.BlockSpec((tm, tk), lambda i, j, k: (i, k))]
    if packed:
        in_specs.append(pl.BlockSpec((tk // 32, tn), lambda i, j, k: (k, j)))
    elif rhs_transposed:
        in_specs.append(pl.BlockSpec((tn, tk), lambda i, j, k: (j, k)))
    else:
        in_specs.append(pl.BlockSpec((tk, tn), lambda i, j, k: (k, j)))
    args.append(w)

    io_aliases = {}
    if b is not None:
        in_specs.append(pl.BlockSpec((1, tn), lambda i, j, k: (0, j)))
        args.append(b)
    if residual is not None:
        if residual.shape == (M, N) and residual.dtype == out_dtype:
            io_aliases = {len(args): 0}   # residual buffer -> residual-stream out
        in_specs.append(pl.BlockSpec((tm, tn), lambda i, j, k: (i, j)))
        args.append(residual)
    if fuse_ln:
        in_specs.append(pl.BlockSpec((1, tn), lambda i, j, k: (0, j)))
        in_specs.append(pl.BlockSpec((1, tn), lambda i, j, k: (0, j)))
        args.extend([ln_g, ln_b])

    out_block = pl.BlockSpec((tm, tn), lambda i, j, k: (i, j))
    if fuse_ln:
        out_shape = (jax.ShapeDtypeStruct((M, N), out_dtype),
                     jax.ShapeDtypeStruct((M, N), out_dtype))
        out_specs = (out_block, out_block)
    else:
        out_shape = jax.ShapeDtypeStruct((M, N), out_dtype)
        out_specs = out_block

    kernel = functools.partial(
        _linear_kernel, packed=packed, rhs_transposed=rhs_transposed,
        activation=activation, has_bias=b is not None,
        has_residual=residual is not None, fuse_ln=fuse_ln, ln_eps=ln_eps)

    return pl.pallas_call(
        kernel,
        out_shape=out_shape,
        grid=grid,
        in_specs=in_specs,
        out_specs=out_specs,
        scratch_shapes=[pltpu.VMEM((tm, tn), jnp.float32)],
        input_output_aliases=io_aliases,
        compiler_params=pltpu.CompilerParams(
            dimension_semantics=("parallel", "parallel", "arbitrary"),
            vmem_limit_bytes=VMEM_LIMIT_BYTES),
    )(*args)


# ----------------------------- LayerNorm kernel -----------------------------

def _layernorm_kernel(x_ref, g_ref, b_ref, o_ref, *, eps):
    x = x_ref[...].astype(jnp.float32)
    mu = jnp.mean(x, axis=-1, keepdims=True)
    var = jnp.mean(jnp.square(x - mu), axis=-1, keepdims=True)
    y = (x - mu) * jax.lax.rsqrt(var + eps)
    o_ref[...] = (y * g_ref[...].astype(jnp.float32)
                  + b_ref[...].astype(jnp.float32)).astype(o_ref.dtype)


def layer_norm(x, g, b, *, eps=1e-5, out_dtype=jnp.bfloat16, tm=512):
    """Row-tiled LayerNorm over the last dim.  x:[M,C]; g,b:[1,C] f32."""
    M, C = x.shape
    tm = _choose_tile(M, tm, 8)
    return pl.pallas_call(
        functools.partial(_layernorm_kernel, eps=eps),
        out_shape=jax.ShapeDtypeStruct((M, C), out_dtype),
        grid=(M // tm,),
        in_specs=[
            pl.BlockSpec((tm, C), lambda i: (i, 0)),
            pl.BlockSpec((1, C), lambda i: (0, 0)),
            pl.BlockSpec((1, C), lambda i: (0, 0)),
        ],
        out_specs=pl.BlockSpec((tm, C), lambda i: (i, 0)),
        compiler_params=pltpu.CompilerParams(
            dimension_semantics=("parallel",),
            vmem_limit_bytes=VMEM_LIMIT_BYTES),
    )(x, g, b)


# ----------------------------- attention kernel -----------------------------

def _attn_kernel(qkv_ref, o_ref, *, n_head, dh, scale):
    """Causal attention over the fused [T, 3C] c_attn output of one batch row.
    Heads are sliced in-kernel (lane slices) -> no XLA head transposes; the
    output is written head-by-head into a lane-dense [T, C] block."""
    T = qkv_ref.shape[1]
    C = n_head * dh
    row = jax.lax.broadcasted_iota(jnp.int32, (T, T), 0)
    col = jax.lax.broadcasted_iota(jnp.int32, (T, T), 1)
    causal = row >= col
    for h in range(n_head):
        # Pre-scale q (O(T*Dh)) instead of the score matrix (O(T^2)).
        q = qkv_ref[0, :, h * dh:(h + 1) * dh] * scale          # [T, Dh] bf16
        kk = qkv_ref[0, :, C + h * dh:C + (h + 1) * dh]         # [T, Dh] bf16
        v = qkv_ref[0, :, 2 * C + h * dh:2 * C + (h + 1) * dh]  # [T, Dh] bf16
        # Contract on the shared Dh axis -> no in-kernel transpose of k.
        s = jax.lax.dot_general(q, kk, (((1,), (1,)), ((), ())),
                                preferred_element_type=jnp.float32)   # [T, T]
        s = jnp.where(causal, s, -1e30)       # safe: scores stay in f32
        m = jnp.max(s, axis=-1, keepdims=True)
        p = jnp.exp(s - m)
        denom = jnp.sum(p, axis=-1, keepdims=True)
        o = jnp.dot(p.astype(v.dtype), v, preferred_element_type=jnp.float32)
        o = o * pl.reciprocal(denom, approx=True)
        o_ref[0, :, h * dh:(h + 1) * dh] = o.astype(o_ref.dtype)


def causal_attention(qkv, n_head):
    """qkv: [B, T, 3C] bf16 (c_attn output) -> [B, T, C] bf16."""
    B, T, three_c = qkv.shape
    C = three_c // 3
    dh = C // n_head
    kernel = functools.partial(_attn_kernel, n_head=n_head, dh=dh,
                               scale=1.0 / math.sqrt(dh))
    return pl.pallas_call(
        kernel,
        out_shape=jax.ShapeDtypeStruct((B, T, C), jnp.bfloat16),
        grid=(B,),
        in_specs=[pl.BlockSpec((1, T, three_c), lambda b: (b, 0, 0))],
        out_specs=pl.BlockSpec((1, T, C), lambda b: (b, 0, 0)),
        compiler_params=pltpu.CompilerParams(
            dimension_semantics=("parallel",),
            vmem_limit_bytes=VMEM_LIMIT_BYTES),
    )(qkv)


# --------------------------- bit packing (glue) -----------------------------

def pack_signs_int32(w_raw):
    """w_raw: [out, in] float.  Returns int32 [in//32, out]; bit i of word
    [k32, n] = (w_raw[n, 32*k32 + i] > 0).  This is the little-endian 4-byte
    reinterpretation of the reference uint8 packing (bit i of byte j <->
    in_feature 8*j + i), stored transposed for the [K, N]-layout matmul."""
    out_f, in_f = w_raw.shape
    assert in_f % 32 == 0, "in_features must be divisible by 32 (true for GPT-2)"
    bits = (w_raw > 0).astype(jnp.uint32).reshape(out_f, in_f // 32, 32)
    shifts = jnp.arange(32, dtype=jnp.uint32)
    words = jnp.sum(bits << shifts[None, None, :], axis=-1, dtype=jnp.uint32)
    words = jax.lax.bitcast_convert_type(words, jnp.int32)   # [out, in//32]
    return jnp.transpose(words, (1, 0))                      # [in//32, out]


def make_bit_linear(key, in_f, out_f, bias_scale=0.02):
    """Bit-packed linear; returns (wp int32 [K//32, N], b f32 [1, N])."""
    kw, kb = jax.random.split(key)
    raw_w = jax.random.normal(kw, (out_f, in_f), jnp.float32) * 0.02
    wp = pack_signs_int32(raw_w)
    b = (jax.random.normal(kb, (out_f,), jnp.float32) * bias_scale).reshape(1, out_f)
    return wp, b


# ------------------------------ model (glue) --------------------------------

def init_params(key, cfg):
    V, C, L, P = cfg["vocab"], cfg["n_embd"], cfg["n_layer"], cfg["n_pos"]
    Vp = ((V + 127) // 128) * 128   # pad vocab so lm_head N-tiling stays 128-aligned
    keys = jax.random.split(key, 2 + L)
    wte = jax.random.normal(keys[0], (V, C), jnp.float32) * 0.02
    wte = jnp.pad(wte, ((0, Vp - V), (0, 0))).astype(jnp.bfloat16)   # [Vp, C]
    wpe = (jax.random.normal(keys[1], (P, C), jnp.float32) * 0.01).astype(jnp.bfloat16)
    params = {
        "wte": wte, "wpe": wpe,
        "ln_f_g": jnp.ones((1, C), jnp.float32),
        "ln_f_b": jnp.zeros((1, C), jnp.float32),
        "blocks": [],
    }
    for l in range(L):
        bk = jax.random.split(keys[2 + l], 4)
        c_attn_w, c_attn_b = make_bit_linear(bk[0], C, 3 * C)
        c_proj_w, c_proj_b = make_bit_linear(bk[1], C, C)
        c_fc_w, c_fc_b = make_bit_linear(bk[2], C, 4 * C)
        c_proj2_w, c_proj2_b = make_bit_linear(bk[3], 4 * C, C)
        params["blocks"].append({
            "ln_1_g": jnp.ones((1, C), jnp.float32),
            "ln_1_b": jnp.zeros((1, C), jnp.float32),
            "attn_c_attn_w": c_attn_w, "attn_c_attn_b": c_attn_b,
            "attn_c_proj_w": c_proj_w, "attn_c_proj_b": c_proj_b,
            "ln_2_g": jnp.ones((1, C), jnp.float32),
            "ln_2_b": jnp.zeros((1, C), jnp.float32),
            "mlp_c_fc_w": c_fc_w, "mlp_c_fc_b": c_fc_b,
            "mlp_c_proj_w": c_proj2_w, "mlp_c_proj_b": c_proj2_b,
        })
    return params


def forward(params, input_ids, cfg):
    B, T = input_ids.shape
    C, V, H = cfg["n_embd"], cfg["vocab"], cfg["n_head"]
    blocks = params["blocks"]
    L = len(blocks)

    tok = jnp.take(params["wte"], input_ids, axis=0)                  # [B,T,C] bf16
    pos_ids = jnp.arange(T, dtype=jnp.int32)
    pos = jnp.take(params["wpe"], pos_ids, axis=0)[None, :, :]        # [1,T,C] bf16
    x = (tok + pos).reshape(B * T, C)                                 # drop = identity (eval)

    # Only standalone LN: block 0's ln_1.  All later LNs (ln_2, next-block ln_1,
    # ln_f) are fused into the preceding c_proj matmul epilogue.
    ln_in = layer_norm(x, blocks[0]["ln_1_g"], blocks[0]["ln_1_b"])

    for l, bp in enumerate(blocks):
        # --- attention ---
        qkv = fused_linear(ln_in, bp["attn_c_attn_w"], bp["attn_c_attn_b"])  # [BT,3C]
        a = causal_attention(qkv.reshape(B, T, 3 * C), H).reshape(B * T, C)
        # c_proj: bias + residual + ln_2 fused; residual buffer aliased to out 0.
        x, ln2 = fused_linear(a, bp["attn_c_proj_w"], bp["attn_c_proj_b"],
                              residual=x, ln_g=bp["ln_2_g"], ln_b=bp["ln_2_b"])
        # --- MLP ---
        ff = fused_linear(ln2, bp["mlp_c_fc_w"], bp["mlp_c_fc_b"],
                          activation="gelu")                                  # [BT,4C]
        if l + 1 < L:
            ng, nb = blocks[l + 1]["ln_1_g"], blocks[l + 1]["ln_1_b"]
        else:
            ng, nb = params["ln_f_g"], params["ln_f_b"]
        x, ln_in = fused_linear(ff, bp["mlp_c_proj_w"], bp["mlp_c_proj_b"],
                                residual=x, ln_g=ng, ln_b=nb)

    # ln_in == ln_f(x).  Tied lm_head (full precision): logits = ln_f(h) @ wte.T,
    # contraction on the shared C axis -> no HBM transpose of the table.
    # TODO(synk): bf16 logits (or fusing the downstream softmax) would halve the
    # largest HBM write; kept f32 for fidelity to the reference output.
    logits = fused_linear(ln_in, params["wte"], None, packed=False,
                          rhs_transposed=True, out_dtype=jnp.float32, tn=512)
    return logits[:, :V].reshape(B, T, V)


# ---------------------------------- main ------------------------------------

if __name__ == "__main__":
    cfg = dict(vocab=64, n_embd=32, n_head=2, n_layer=2, n_pos=16)

    key = jax.random.PRNGKey(0)
    pkey, ikey = jax.random.split(key)
    params = init_params(pkey, cfg)

    B, T = 2, 8
    input_ids = jax.random.randint(ikey, (B, T), 0, cfg["vocab"], dtype=jnp.int32)

    fwd = jax.jit(functools.partial(forward, cfg=cfg))
    logits = jax.block_until_ready(fwd(params, input_ids))

    assert logits.shape == (B, T, cfg["vocab"])
    assert bool(jnp.all(jnp.isfinite(logits)))
    print("KERNEL_OK")
</pallas_src>

<mosaic_0001>
module attributes {stable_mosaic.version = 11 : i64} {
  func.func @_linear_kernel(%arg0: i32, %arg1: i32, %arg2: i32, %arg3: memref<16x32xbf16, #tpu.memory_space<vmem>>, %arg4: memref<1x32xi32, #tpu.memory_space<vmem>>, %arg5: memref<1x32xf32, #tpu.memory_space<vmem>>, %arg6: memref<16x32xbf16, #tpu.memory_space<vmem>>, %arg7: memref<1x32xf32, #tpu.memory_space<vmem>>, %arg8: memref<1x32xf32, #tpu.memory_space<vmem>>, %arg9: memref<16x32xbf16, #tpu.memory_space<vmem>>, %arg10: memref<16x32xbf16, #tpu.memory_space<vmem>>, %arg11: memref<16x32xf32, #tpu.memory_space<vmem>>) attributes {dimension_semantics = [#tpu.dimension_semantics<parallel>, #tpu.dimension_semantics<parallel>, #tpu.dimension_semantics<arbitrary>], iteration_bounds = array<i64: 1, 1, 1>, scalar_prefetch = 0 : i64, scratch_operands = 1 : i64, tpu.core_type = #tpu.core_type<tc>, window_params = [{transform_indices = @transform_0, window_bounds = array<i64: 16, 32>}, {transform_indices = @transform_1, window_bounds = array<i64: 1, 32>}, {transform_indices = @transform_2, window_bounds = array<i64: 1, 32>}, {transform_indices = @transform_3, window_bounds = array<i64: 16, 32>}, {transform_indices = @transform_4, window_bounds = array<i64: 1, 32>}, {transform_indices = @transform_5, window_bounds = array<i64: 1, 32>}, {transform_indices = @transform_6, window_bounds = array<i64: 16, 32>}, {transform_indices = @transform_7, window_bounds = array<i64: 16, 32>}]} {
    %c0_i32 = arith.constant 0 : i32
    %0 = arith.cmpi eq, %arg2, %c0_i32 : i32
    %1 = arith.extui %0 : i1 to i32
    %c0_i32_0 = arith.constant 0 : i32
    %2 = arith.cmpi ne, %1, %c0_i32_0 : i32
    scf.if %2 {
      %cst_13 = arith.constant 0.000000e+00 : f32
      %26 = vector.broadcast %cst_13 : f32 to vector<16x32xf32>
      %c0_14 = arith.constant 0 : index
      %c0_15 = arith.constant 0 : index
      %27 = vector.load %arg11[%c0_14, %c0_15] : memref<16x32xf32, #tpu.memory_space<vmem>>, vector<16x32xf32>
      tpu.vector_store %arg11[%c0_14, %c0_15], %26 {strides = array<i32>} : memref<16x32xf32, #tpu.memory_space<vmem>>, vector<16x32xf32>,
    } else {
    }
    %c0 = arith.constant 0 : index
    %c0_1 = arith.constant 0 : index
    %3 = vector.load %arg3[%c0, %c0_1] : memref<16x32xbf16, #tpu.memory_space<vmem>>, vector<16x32xbf16>
    %c0_2 = arith.constant 0 : index
    %c0_3 = arith.constant 0 : index
    %4 = vector.load %arg4[%c0_2, %c0_3] : memref<1x32xi32, #tpu.memory_space<vmem>>, vector<1x32xi32>
    %5 = tpu.iota {dimensions = array<i32: 1>} : vector<1x32x32xi32>
    %6 = vector.shape_cast %4 : vector<1x32xi32> to vector<1x1x32xi32>
    %7 = vector.shape_cast %6 : vector<1x1x32xi32> to vector<1x1x32xi32>
    %8 = vector.broadcast %7 : vector<1x1x32xi32> to vector<1x32x32xi32>
    %9 = arith.shrui %8, %5 : vector<1x32x32xi32>
    %c1_i32 = arith.constant 1 : i32
    %10 = vector.broadcast %c1_i32 : i32 to vector<1x32x32xi32>
    %11 = arith.andi %9, %10 : vector<1x32x32xi32>
    %c1_i32_4 = arith.constant 1 : i32
    %12 = vector.broadcast %c1_i32_4 : i32 to vector<1x32x32xi32>
    %13 = arith.cmpi eq, %11, %12 : vector<1x32x32xi32>
    %cst = arith.constant 1.000000e+00 : f32
    %cst_5 = arith.constant -1.000000e+00 : f32
    %14 = vector.broadcast %cst : f32 to vector<1x32x32xf32>
    %15 = vector.broadcast %cst_5 : f32 to vector<1x32x32xf32>
    %16 = arith.select %13, %14, %15 : vector<1x32x32xi1>, vector<1x32x32xf32>
    %17 = vector.shape_cast %16 : vector<1x32x32xf32> to vector<32x32xf32>
    %18 = arith.truncf %17 : vector<32x32xf32> to vector<32x32xbf16>
    %c0_6 = arith.constant 0 : index
    %c0_7 = arith.constant 0 : index
    %19 = vector.load %arg11[%c0_6, %c0_7] : memref<16x32xf32, #tpu.memory_space<vmem>>, vector<16x32xf32>
    %cst_8 = arith.constant dense<0.000000e+00> : vector<16x32xf32>
    %20 = tpu.matmul %3, %18, %cst_8 {dimension_numbers = #tpu.dot_dimension_numbers<[1], [0], [0], [1], [0, 0, 1, 1], [], []>} : vector<16x32xbf16>, vector<32x32xbf16>, vector<16x32xf32> -> vector<16x32xf32>
    %21 = arith.addf %19, %20 : vector<16x32xf32>
    %c0_9 = arith.constant 0 : index
    %c0_10 = arith.constant 0 : index
    %22 = vector.load %arg11[%c0_9, %c0_10] : memref<16x32xf32, #tpu.memory_space<vmem>>, vector<16x32xf32>
    tpu.vector_store %arg11[%c0_9, %c0_10], %21 {strides = array<i32>} : memref<16x32xf32, #tpu.memory_space<vmem>>, vector<16x32xf32>,
    %c0_i32_11 = arith.constant 0 : i32
    %23 = arith.cmpi eq, %arg2, %c0_i32_11 : i32
    %24 = arith.extui %23 : i1 to i32
    %c0_i32_12 = arith.constant 0 : i32
    %25 = arith.cmpi ne, %24, %c0_i32_12 : i32
    scf.if %25 {
      %c0_13 = arith.constant 0 : index
      %c0_14 = arith.constant 0 : index
      %26 = vector.load %arg11[%c0_13, %c0_14] : memref<16x32xf32, #tpu.memory_space<vmem>>, vector<16x32xf32>
      %c0_15 = arith.constant 0 : index
      %c0_16 = arith.constant 0 : index
      %27 = vector.load %arg5[%c0_15, %c0_16] : memref<1x32xf32, #tpu.memory_space<vmem>>, vector<1x32xf32>
      %28 = vector.broadcast %27 : vector<1x32xf32> to vector<16x32xf32>
      %29 = arith.addf %26, %28 : vector<16x32xf32>
      %c0_17 = arith.constant 0 : index
      %c0_18 = arith.constant 0 : index
      %30 = vector.load %arg6[%c0_17, %c0_18] : memref<16x32xbf16, #tpu.memory_space<vmem>>, vector<16x32xbf16>
      %31 = arith.extf %30 : vector<16x32xbf16> to vector<16x32xf32>
      %32 = arith.addf %29, %31 : vector<16x32xf32>
      %33 = arith.truncf %32 : vector<16x32xf32> to vector<16x32xbf16>
      %c0_19 = arith.constant 0 : index
      %c0_20 = arith.constant 0 : index
      %34 = vector.load %arg9[%c0_19, %c0_20] : memref<16x32xbf16, #tpu.memory_space<vmem>>, vector<16x32xbf16>
      tpu.vector_store %arg9[%c0_19, %c0_20], %33 {strides = array<i32>} : memref<16x32xbf16, #tpu.memory_space<vmem>>, vector<16x32xbf16>,
      %cst_21 = arith.constant dense<0.000000e+00> : vector<16xf32>
      %35 = vector.multi_reduction <add>, %32, %cst_21 [1] : vector<16x32xf32> to vector<16xf32>
      %36 = vector.shape_cast %35 : vector<16xf32> to vector<16x1xf32>
      %cst_22 = arith.constant 3.200000e+01 : f32
      %37 = vector.broadcast %cst_22 : f32 to vector<16x1xf32>
      %38 = arith.divf %36, %37 : vector<16x1xf32>
      %39 = vector.broadcast %38 : vector<16x1xf32> to vector<16x32xf32>
      %40 = arith.subf %32, %39 : vector<16x32xf32>
      %41 = arith.mulf %40, %40 : vector<16x32xf32>
      %cst_23 = arith.constant dense<0.000000e+00> : vector<16xf32>
      %42 = vector.multi_reduction <add>, %41, %cst_23 [1] : vector<16x32xf32> to vector<16xf32>
      %43 = vector.shape_cast %42 : vector<16xf32> to vector<16x1xf32>
      %cst_24 = arith.constant 3.200000e+01 : f32
      %44 = vector.broadcast %cst_24 : f32 to vector<16x1xf32>
      %45 = arith.divf %43, %44 : vector<16x1xf32>
      %46 = vector.broadcast %38 : vector<16x1xf32> to vector<16x32xf32>
      %47 = arith.subf %32, %46 : vector<16x32xf32>
      %cst_25 = arith.constant 9.99999974E-6 : f32
      %48 = vector.broadcast %cst_25 : f32 to vector<16x1xf32>
      %49 = arith.addf %45, %48 : vector<16x1xf32>
      %50 = math.rsqrt %49 : vector<16x1xf32>
      %51 = vector.broadcast %50 : vector<16x1xf32> to vector<16x32xf32>
      %52 = arith.mulf %47, %51 : vector<16x32xf32>
      %c0_26 = arith.constant 0 : index
      %c0_27 = arith.constant 0 : index
      %53 = vector.load %arg7[%c0_26, %c0_27] : memref<1x32xf32, #tpu.memory_space<vmem>>, vector<1x32xf32>
      %54 = vector.broadcast %53 : vector<1x32xf32> to vector<16x32xf32>
      %55 = arith.mulf %52, %54 : vector<16x32xf32>
      %c0_28 = arith.constant 0 : index
      %c0_29 = arith.constant 0 : index
      %56 = vector.load %arg8[%c0_28, %c0_29] : memref<1x32xf32, #tpu.memory_space<vmem>>, vector<1x32xf32>
      %57 = vector.broadcast %56 : vector<1x32xf32> to vector<16x32xf32>
      %58 = arith.addf %55, %57 : vector<16x32xf32>
      %59 = arith.truncf %58 : vector<16x32xf32> to vector<16x32xbf16>
      %c0_30 = arith.constant 0 : index
      %c0_31 = arith.constant 0 : index
      %60 = vector.load %arg10[%c0_30, %c0_31] : memref<16x32xbf16, #tpu.memory_space<vmem>>, vector<16x32xbf16>
      tpu.vector_store %arg10[%c0_30, %c0_31], %59 {strides = array<i32>} : memref<16x32xbf16, #tpu.memory_space<vmem>>, vector<16x32xbf16>,
    } else {
    }
    return
  }
  func.func @transform_0(%arg0: i32, %arg1: i32, %arg2: i32) -> (i32, i32) {
    %c0_i32 = arith.constant 0 : i32
    return %arg0, %arg2 : i32, i32
  }
  func.func @transform_1(%arg0: i32, %arg1: i32, %arg2: i32) -> (i32, i32) {
    %c0_i32 = arith.constant 0 : i32
    return %arg2, %arg1 : i32, i32
  }
  func.func @transform_2(%arg0: i32, %arg1: i32, %arg2: i32) -> (i32, i32) {
    %c0_i32 = arith.constant 0 : i32
    %c0_i32_0 = arith.constant 0 : i32
    return %c0_i32, %arg1 : i32, i32
  }
  func.func @transform_3(%arg0: i32, %arg1: i32, %arg2: i32) -> (i32, i32) {
    %c0_i32 = arith.constant 0 : i32
    return %arg0, %arg1 : i32, i32
  }
  func.func @transform_4(%arg0: i32, %arg1: i32, %arg2: i32) -> (i32, i32) {
    %c0_i32 = arith.constant 0 : i32
    %c0_i32_0 = arith.constant 0 : i32
    return %c0_i32, %arg1 : i32, i32
  }
  func.func @transform_5(%arg0: i32, %arg1: i32, %arg2: i32) -> (i32, i32) {
    %c0_i32 = arith.constant 0 : i32
    %c0_i32_0 = arith.constant 0 : i32
    return %c0_i32, %arg1 : i32, i32
  }
  func.func @transform_6(%arg0: i32, %arg1: i32, %arg2: i32) -> (i32, i32) {
    %c0_i32 = arith.constant 0 : i32
    return %arg0, %arg1 : i32, i32
  }
  func.func @transform_7(%arg0: i32, %arg1: i32, %arg2: i32) -> (i32, i32) {
    %c0_i32 = arith.constant 0 : i32
    return %arg0, %arg1 : i32, i32
  }
}

module attributes {stable_mosaic.version = 11 : i64} {
  func.func @_layernorm_kernel(%arg0: i32, %arg1: memref<16x32xbf16, #tpu.memory_space<vmem>>, %arg2: memref<1x32xf32, #tpu.memory_space<vmem>>, %arg3: memref<1x32xf32, #tpu.memory_space<vmem>>, %arg4: memref<16x32xbf16, #tpu.memory_space<vmem>>) attributes {dimension_semantics = [#tpu.dimension_semantics<parallel>], iteration_bounds = array<i64: 1>, scalar_prefetch = 0 : i64, scratch_operands = 0 : i64, tpu.core_type = #tpu.core_type<tc>, window_params = [{transform_indices = @transform_0, window_bounds = array<i64: 16, 32>}, {pipeline_mode = #tpu.pipeline_mode<synchronous>, transform_indices = @transform_1, window_bounds = array<i64: 1, 32>}, {pipeline_mode = #tpu.pipeline_mode<synchronous>, transform_indices = @transform_2, window_bounds = array<i64: 1, 32>}, {transform_indices = @transform_3, window_bounds = array<i64: 16, 32>}]} {
    %c0 = arith.constant 0 : index
    %c0_0 = arith.constant 0 : index
    %0 = vector.load %arg1[%c0, %c0_0] : memref<16x32xbf16, #tpu.memory_space<vmem>>, vector<16x32xbf16>
    %1 = arith.extf %0 : vector<16x32xbf16> to vector<16x32xf32>
    %cst = arith.constant dense<0.000000e+00> : vector<16xf32>
    %2 = vector.multi_reduction <add>, %1, %cst [1] : vector<16x32xf32> to vector<16xf32>
    %3 = vector.shape_cast %2 : vector<16xf32> to vector<16x1xf32>
    %cst_1 = arith.constant 3.200000e+01 : f32
    %4 = vector.broadcast %cst_1 : f32 to vector<16x1xf32>
    %5 = arith.divf %3, %4 : vector<16x1xf32>
    %6 = vector.broadcast %5 : vector<16x1xf32> to vector<16x32xf32>
    %7 = arith.subf %1, %6 : vector<16x32xf32>
    %8 = arith.mulf %7, %7 : vector<16x32xf32>
    %cst_2 = arith.constant dense<0.000000e+00> : vector<16xf32>
    %9 = vector.multi_reduction <add>, %8, %cst_2 [1] : vector<16x32xf32> to vector<16xf32>
    %10 = vector.shape_cast %9 : vector<16xf32> to vector<16x1xf32>
    %cst_3 = arith.constant 3.200000e+01 : f32
    %11 = vector.broadcast %cst_3 : f32 to vector<16x1xf32>
    %12 = arith.divf %10, %11 : vector<16x1xf32>
    %13 = vector.broadcast %5 : vector<16x1xf32> to vector<16x32xf32>
    %14 = arith.subf %1, %13 : vector<16x32xf32>
    %cst_4 = arith.constant 9.99999974E-6 : f32
    %15 = vector.broadcast %cst_4 : f32 to vector<16x1xf32>
    %16 = arith.addf %12, %15 : vector<16x1xf32>
    %17 = math.rsqrt %16 : vector<16x1xf32>
    %18 = vector.broadcast %17 : vector<16x1xf32> to vector<16x32xf32>
    %19 = arith.mulf %14, %18 : vector<16x32xf32>
    %c0_5 = arith.constant 0 : index
    %c0_6 = arith.constant 0 : index
    %20 = vector.load %arg2[%c0_5, %c0_6] : memref<1x32xf32, #tpu.memory_space<vmem>>, vector<1x32xf32>
    %21 = vector.broadcast %20 : vector<1x32xf32> to vector<16x32xf32>
    %22 = arith.mulf %19, %21 : vector<16x32xf32>
    %c0_7 = arith.constant 0 : index
    %c0_8 = arith.constant 0 : index
    %23 = vector.load %arg3[%c0_7, %c0_8] : memref<1x32xf32, #tpu.memory_space<vmem>>, vector<1x32xf32>
    %24 = vector.broadcast %23 : vector<1x32xf32> to vector<16x32xf32>
    %25 = arith.addf %22, %24 : vector<16x32xf32>
    %26 = arith.truncf %25 : vector<16x32xf32> to vector<16x32xbf16>
    %c0_9 = arith.constant 0 : index
    %c0_10 = arith.constant 0 : index
    %27 = vector.load %arg4[%c0_9, %c0_10] : memref<16x32xbf16, #tpu.memory_space<vmem>>, vector<16x32xbf16>
    tpu.vector_store %arg4[%c0_9, %c0_10], %26 {strides = array<i32>} : memref<16x32xbf16, #tpu.memory_space<vmem>>, vector<16x32xbf16>,
    return
  }
  func.func @transform_0(%arg0: i32) -> (i32, i32) {
    %c0_i32 = arith.constant 0 : i32
    %c0_i32_0 = arith.constant 0 : i32
    return %arg0, %c0_i32 : i32, i32
  }
  func.func @transform_1(%arg0: i32) -> (i32, i32) {
    %c0_i32 = arith.constant 0 : i32
    %c0_i32_0 = arith.constant 0 : i32
    %c0_i32_1 = arith.constant 0 : i32
    return %c0_i32, %c0_i32_0 : i32, i32
  }
  func.func @transform_2(%arg0: i32) -> (i32, i32) {
    %c0_i32 = arith.constant 0 : i32
    %c0_i32_0 = arith.constant 0 : i32
    %c0_i32_1 = arith.constant 0 : i32
    return %c0_i32, %c0_i32_0 : i32, i32
  }
  func.func @transform_3(%arg0: i32) -> (i32, i32) {
    %c0_i32 = arith.constant 0 : i32
    %c0_i32_0 = arith.constant 0 : i32
    return %arg0, %c0_i32 : i32, i32
  }
}

module attributes {stable_mosaic.version = 11 : i64} {
  func.func @_linear_kernel(%arg0: i32, %arg1: i32, %arg2: i32, %arg3: memref<16x32xbf16, #tpu.memory_space<vmem>>, %arg4: memref<1x96xi32, #tpu.memory_space<vmem>>, %arg5: memref<1x96xf32, #tpu.memory_space<vmem>>, %arg6: memref<16x96xbf16, #tpu.memory_space<vmem>>, %arg7: memref<16x96xf32, #tpu.memory_space<vmem>>) attributes {dimension_semantics = [#tpu.dimension_semantics<parallel>, #tpu.dimension_semantics<parallel>, #tpu.dimension_semantics<arbitrary>], iteration_bounds = array<i64: 1, 1, 1>, scalar_prefetch = 0 : i64, scratch_operands = 1 : i64, tpu.core_type = #tpu.core_type<tc>, window_params = [{transform_indices = @transform_0, window_bounds = array<i64: 16, 32>}, {transform_indices = @transform_1, window_bounds = array<i64: 1, 96>}, {transform_indices = @transform_2, window_bounds = array<i64: 1, 96>}, {transform_indices = @transform_3, window_bounds = array<i64: 16, 96>}]} {
    %c0_i32 = arith.constant 0 : i32
    %0 = arith.cmpi eq, %arg2, %c0_i32 : i32
    %1 = arith.extui %0 : i1 to i32
    %c0_i32_0 = arith.constant 0 : i32
    %2 = arith.cmpi ne, %1, %c0_i32_0 : i32
    scf.if %2 {
      %cst_13 = arith.constant 0.000000e+00 : f32
      %26 = vector.broadcast %cst_13 : f32 to vector<16x96xf32>
      %c0_14 = arith.constant 0 : index
      %c0_15 = arith.constant 0 : index
      %27 = vector.load %arg7[%c0_14, %c0_15] : memref<16x96xf32, #tpu.memory_space<vmem>>, vector<16x96xf32>
      tpu.vector_store %arg7[%c0_14, %c0_15], %26 {strides = array<i32>} : memref<16x96xf32, #tpu.memory_space<vmem>>, vector<16x96xf32>,
    } else {
    }
    %c0 = arith.constant 0 : index
    %c0_1 = arith.constant 0 : index
    %3 = vector.load %arg3[%c0, %c0_1] : memref<16x32xbf16, #tpu.memory_space<vmem>>, vector<16x32xbf16>
    %c0_2 = arith.constant 0 : index
    %c0_3 = arith.constant 0 : index
    %4 = vector.load %arg4[%c0_2, %c0_3] : memref<1x96xi32, #tpu.memory_space<vmem>>, vector<1x96xi32>
    %5 = tpu.iota {dimensions = array<i32: 1>} : vector<1x32x96xi32>
    %6 = vector.shape_cast %4 : vector<1x96xi32> to vector<1x1x96xi32>
    %7 = vector.shape_cast %6 : vector<1x1x96xi32> to vector<1x1x96xi32>
    %8 = vector.broadcast %7 : vector<1x1x96xi32> to vector<1x32x96xi32>
    %9 = arith.shrui %8, %5 : vector<1x32x96xi32>
    %c1_i32 = arith.constant 1 : i32
    %10 = vector.broadcast %c1_i32 : i32 to vector<1x32x96xi32>
    %11 = arith.andi %9, %10 : vector<1x32x96xi32>
    %c1_i32_4 = arith.constant 1 : i32
    %12 = vector.broadcast %c1_i32_4 : i32 to vector<1x32x96xi32>
    %13 = arith.cmpi eq, %11, %12 : vector<1x32x96xi32>
    %cst = arith.constant 1.000000e+00 : f32
    %cst_5 = arith.constant -1.000000e+00 : f32
    %14 = vector.broadcast %cst : f32 to vector<1x32x96xf32>
    %15 = vector.broadcast %cst_5 : f32 to vector<1x32x96xf32>
    %16 = arith.select %13, %14, %15 : vector<1x32x96xi1>, vector<1x32x96xf32>
    %17 = vector.shape_cast %16 : vector<1x32x96xf32> to vector<32x96xf32>
    %18 = arith.truncf %17 : vector<32x96xf32> to vector<32x96xbf16>
    %c0_6 = arith.constant 0 : index
    %c0_7 = arith.constant 0 : index
    %19 = vector.load %arg7[%c0_6, %c0_7] : memref<16x96xf32, #tpu.memory_space<vmem>>, vector<16x96xf32>
    %cst_8 = arith.constant dense<0.000000e+00> : vector<16x96xf32>
    %20 = tpu.matmul %3, %18, %cst_8 {dimension_numbers = #tpu.dot_dimension_numbers<[1], [0], [0], [1], [0, 0, 1, 1], [], []>} : vector<16x32xbf16>, vector<32x96xbf16>, vector<16x96xf32> -> vector<16x96xf32>
    %21 = arith.addf %19, %20 : vector<16x96xf32>
    %c0_9 = arith.constant 0 : index
    %c0_10 = arith.constant 0 : index
    %22 = vector.load %arg7[%c0_9, %c0_10] : memref<16x96xf32, #tpu.memory_space<vmem>>, vector<16x96xf32>
    tpu.vector_store %arg7[%c0_9, %c0_10], %21 {strides = array<i32>} : memref<16x96xf32, #tpu.memory_space<vmem>>, vector<16x96xf32>,
    %c0_i32_11 = arith.constant 0 : i32
    %23 = arith.cmpi eq, %arg2, %c0_i32_11 : i32
    %24 = arith.extui %23 : i1 to i32
    %c0_i32_12 = arith.constant 0 : i32
    %25 = arith.cmpi ne, %24, %c0_i32_12 : i32
    scf.if %25 {
      %c0_13 = arith.constant 0 : index
      %c0_14 = arith.constant 0 : index
      %26 = vector.load %arg7[%c0_13, %c0_14] : memref<16x96xf32, #tpu.memory_space<vmem>>, vector<16x96xf32>
      %c0_15 = arith.constant 0 : index
      %c0_16 = arith.constant 0 : index
      %27 = vector.load %arg5[%c0_15, %c0_16] : memref<1x96xf32, #tpu.memory_space<vmem>>, vector<1x96xf32>
      %28 = vector.broadcast %27 : vector<1x96xf32> to vector<16x96xf32>
      %29 = arith.addf %26, %28 : vector<16x96xf32>
      %30 = arith.truncf %29 : vector<16x96xf32> to vector<16x96xbf16>
      %c0_17 = arith.constant 0 : index
      %c0_18 = arith.constant 0 : index
      %31 = vector.load %arg6[%c0_17, %c0_18] : memref<16x96xbf16, #tpu.memory_space<vmem>>, vector<16x96xbf16>
      tpu.vector_store %arg6[%c0_17, %c0_18], %30 {strides = array<i32>} : memref<16x96xbf16, #tpu.memory_space<vmem>>, vector<16x96xbf16>,
    } else {
    }
    return
  }
  func.func @transform_0(%arg0: i32, %arg1: i32, %arg2: i32) -> (i32, i32) {
    %c0_i32 = arith.constant 0 : i32
    return %arg0, %arg2 : i32, i32
  }
  func.func @transform_1(%arg0: i32, %arg1: i32, %arg2: i32) -> (i32, i32) {
    %c0_i32 = arith.constant 0 : i32
    return %arg2, %arg1 : i32, i32
  }
  func.func @transform_2(%arg0: i32, %arg1: i32, %arg2: i32) -> (i32, i32) {
    %c0_i32 = arith.constant 0 : i32
    %c0_i32_0 = arith.constant 0 : i32
    return %c0_i32, %arg1 : i32, i32
  }
  func.func @transform_3(%arg0: i32, %arg1: i32, %arg2: i32) -> (i32, i32) {
    %c0_i32 = arith.constant 0 : i32
    return %arg0, %arg1 : i32, i32
  }
}

module attributes {stable_mosaic.version = 11 : i64} {
  func.func @_attn_kernel(%arg0: i32, %arg1: memref<1x8x96xbf16, #tpu.memory_space<vmem>>, %arg2: memref<1x8x32xbf16, #tpu.memory_space<vmem>>) attributes {dimension_semantics = [#tpu.dimension_semantics<parallel>], iteration_bounds = array<i64: 2>, scalar_prefetch = 0 : i64, scratch_operands = 0 : i64, tpu.core_type = #tpu.core_type<tc>, window_params = [{transform_indices = @transform_0, window_bounds = array<i64: 1, 8, 96>}, {transform_indices = @transform_1, window_bounds = array<i64: 1, 8, 32>}]} {
    %0 = tpu.iota {dimensions = array<i32: 0>} : vector<8x8xi32>
    %1 = tpu.iota {dimensions = array<i32: 1>} : vector<8x8xi32>
    %2 = arith.cmpi sge, %0, %1 : vector<8x8xi32>
    %c0 = arith.constant 0 : index
    %c0_0 = arith.constant 0 : index
    %c0_1 = arith.constant 0 : index
    %3 = vector.load %arg1[%c0, %c0_0, %c0_1] : memref<1x8x96xbf16, #tpu.memory_space<vmem>>, vector<1x8x16xbf16>
    %4 = vector.shape_cast %3 : vector<1x8x16xbf16> to vector<8x16xbf16>
    %cst = arith.constant 2.500000e-01 : bf16
    %5 = vector.broadcast %cst : bf16 to vector<8x16xbf16>
    %6 = arith.mulf %4, %5 : vector<8x16xbf16>
    %c0_2 = arith.constant 0 : index
    %c0_3 = arith.constant 0 : index
    %c32 = arith.constant 32 : index
    %7 = vector.load %arg1[%c0_2, %c0_3, %c32] : memref<1x8x96xbf16, #tpu.memory_space<vmem>>, vector<1x8x16xbf16>
    %8 = vector.shape_cast %7 : vector<1x8x16xbf16> to vector<8x16xbf16>
    %c0_4 = arith.constant 0 : index
    %c0_5 = arith.constant 0 : index
    %c64 = arith.constant 64 : index
    %9 = vector.load %arg1[%c0_4, %c0_5, %c64] : memref<1x8x96xbf16, #tpu.memory_space<vmem>>, vector<1x8x16xbf16>
    %10 = vector.shape_cast %9 : vector<1x8x16xbf16> to vector<8x16xbf16>
    %cst_6 = arith.constant dense<0.000000e+00> : vector<8x8xf32>
    %11 = tpu.matmul %6, %8, %cst_6 {dimension_numbers = #tpu.dot_dimension_numbers<[1], [1], [0], [0], [0, 0, 1, 0], [], []>} : vector<8x16xbf16>, vector<8x16xbf16>, vector<8x8xf32> -> vector<8x8xf32>
    %cst_7 = arith.constant -1.000000e+30 : f32
    %12 = vector.broadcast %cst_7 : f32 to vector<8x8xf32>
    %13 = arith.select %2, %11, %12 : vector<8x8xi1>, vector<8x8xf32>
    %cst_8 = arith.constant dense<0xFF800000> : vector<8xf32>
    %14 = vector.multi_reduction <maximumf>, %13, %cst_8 [1] : vector<8x8xf32> to vector<8xf32>
    %15 = vector.shape_cast %14 : vector<8xf32> to vector<8x1xf32>
    %16 = vector.broadcast %15 : vector<8x1xf32> to vector<8x8xf32>
    %17 = arith.subf %13, %16 : vector<8x8xf32>
    %18 = math.exp %17 : vector<8x8xf32>
    %cst_9 = arith.constant dense<0.000000e+00> : vector<8xf32>
    %19 = vector.multi_reduction <add>, %18, %cst_9 [1] : vector<8x8xf32> to vector<8xf32>
    %20 = vector.shape_cast %19 : vector<8xf32> to vector<8x1xf32>
    %21 = arith.truncf %18 : vector<8x8xf32> to vector<8x8xbf16>
    %cst_10 = arith.constant dense<0.000000e+00> : vector<8x16xf32>
    %22 = tpu.matmul %21, %10, %cst_10 {dimension_numbers = #tpu.dot_dimension_numbers<[1], [0], [0], [1], [0, 0, 1, 1], [], []>} : vector<8x8xbf16>, vector<8x16xbf16>, vector<8x16xf32> -> vector<8x16xf32>
    %23 = tpu.reciprocal %20 {approx = true} : vector<8x1xf32> -> vector<8x1xf32>
    %24 = vector.broadcast %23 : vector<8x1xf32> to vector<8x16xf32>
    %25 = arith.mulf %22, %24 : vector<8x16xf32>
    %26 = arith.truncf %25 : vector<8x16xf32> to vector<8x16xbf16>
    %c0_11 = arith.constant 0 : index
    %c0_12 = arith.constant 0 : index
    %c0_13 = arith.constant 0 : index
    %27 = vector.load %arg2[%c0_11, %c0_12, %c0_13] : memref<1x8x32xbf16, #tpu.memory_space<vmem>>, vector<1x8x16xbf16>
    %28 = vector.shape_cast %27 : vector<1x8x16xbf16> to vector<8x16xbf16>
    %29 = vector.shape_cast %26 : vector<8x16xbf16> to vector<1x8x16xbf16>
    tpu.vector_store %arg2[%c0_11, %c0_12, %c0_13], %29 {strides = array<i32>} : memref<1x8x32xbf16, #tpu.memory_space<vmem>>, vector<1x8x16xbf16>,
    %c0_14 = arith.constant 0 : index
    %c0_15 = arith.constant 0 : index
    %c16 = arith.constant 16 : index
    %30 = vector.load %arg1[%c0_14, %c0_15, %c16] : memref<1x8x96xbf16, #tpu.memory_space<vmem>>, vector<1x8x16xbf16>
    %31 = vector.shape_cast %30 : vector<1x8x16xbf16> to vector<8x16xbf16>
    %cst_16 = arith.constant 2.500000e-01 : bf16
    %32 = vector.broadcast %cst_16 : bf16 to vector<8x16xbf16>
    %33 = arith.mulf %31, %32 : vector<8x16xbf16>
    %c0_17 = arith.constant 0 : index
    %c0_18 = arith.constant 0 : index
    %c48 = arith.constant 48 : index
    %34 = vector.load %arg1[%c0_17, %c0_18, %c48] : memref<1x8x96xbf16, #tpu.memory_space<vmem>>, vector<1x8x16xbf16>
    %35 = vector.shape_cast %34 : vector<1x8x16xbf16> to vector<8x16xbf16>
    %c0_19 = arith.constant 0 : index
    %c0_20 = arith.constant 0 : index
    %c80 = arith.constant 80 : index
    %36 = vector.load %arg1[%c0_19, %c0_20, %c80] : memref<1x8x96xbf16, #tpu.memory_space<vmem>>, vector<1x8x16xbf16>
    %37 = vector.shape_cast %36 : vector<1x8x16xbf16> to vector<8x16xbf16>
    %cst_21 = arith.constant dense<0.000000e+00> : vector<8x8xf32>
    %38 = tpu.matmul %33, %35, %cst_21 {dimension_numbers = #tpu.dot_dimension_numbers<[1], [1], [0], [0], [0, 0, 1, 0], [], []>} : vector<8x16xbf16>, vector<8x16xbf16>, vector<8x8xf32> -> vector<8x8xf32>
    %cst_22 = arith.constant -1.000000e+30 : f32
    %39 = vector.broadcast %cst_22 : f32 to vector<8x8xf32>
    %40 = arith.select %2, %38, %39 : vector<8x8xi1>, vector<8x8xf32>
    %cst_23 = arith.constant dense<0xFF800000> : vector<8xf32>
    %41 = vector.multi_reduction <maximumf>, %40, %cst_23 [1] : vector<8x8xf32> to vector<8xf32>
    %42 = vector.shape_cast %41 : vector<8xf32> to vector<8x1xf32>
    %43 = vector.broadcast %42 : vector<8x1xf32> to vector<8x8xf32>
    %44 = arith.subf %40, %43 : vector<8x8xf32>
    %45 = math.exp %44 : vector<8x8xf32>
    %cst_24 = arith.constant dense<0.000000e+00> : vector<8xf32>
    %46 = vector.multi_reduction <add>, %45, %cst_24 [1] : vector<8x8xf32> to vector<8xf32>
    %47 = vector.shape_cast %46 : vector<8xf32> to vector<8x1xf32>
    %48 = arith.truncf %45 : vector<8x8xf32> to vector<8x8xbf16>
    %cst_25 = arith.constant dense<0.000000e+00> : vector<8x16xf32>
    %49 = tpu.matmul %48, %37, %cst_25 {dimension_numbers = #tpu.dot_dimension_numbers<[1], [0], [0], [1], [0, 0, 1, 1], [], []>} : vector<8x8xbf16>, vector<8x16xbf16>, vector<8x16xf32> -> vector<8x16xf32>
    %50 = tpu.reciprocal %47 {approx = true} : vector<8x1xf32> -> vector<8x1xf32>
    %51 = vector.broadcast %50 : vector<8x1xf32> to vector<8x16xf32>
    %52 = arith.mulf %49, %51 : vector<8x16xf32>
    %53 = arith.truncf %52 : vector<8x16xf32> to vector<8x16xbf16>
    %c0_26 = arith.constant 0 : index
    %c0_27 = arith.constant 0 : index
    %c16_28 = arith.constant 16 : index
    %54 = vector.load %arg2[%c0_26, %c0_27, %c16_28] : memref<1x8x32xbf16, #tpu.memory_space<vmem>>, vector<1x8x16xbf16>
    %55 = vector.shape_cast %54 : vector<1x8x16xbf16> to vector<8x16xbf16>
    %56 = vector.shape_cast %53 : vector<8x16xbf16> to vector<1x8x16xbf16>
    tpu.vector_store %arg2[%c0_26, %c0_27, %c16_28], %56 {strides = array<i32>} : memref<1x8x32xbf16, #tpu.memory_space<vmem>>, vector<1x8x16xbf16>,
    return
  }
  func.func @transform_0(%arg0: i32) -> (i32, i32, i32) {
    %c0_i32 = arith.constant 0 : i32
    %c0_i32_0 = arith.constant 0 : i32
    %c0_i32_1 = arith.constant 0 : i32
    return %arg0, %c0_i32, %c0_i32_0 : i32, i32, i32
  }
  func.func @transform_1(%arg0: i32) -> (i32, i32, i32) {
    %c0_i32 = arith.constant 0 : i32
    %c0_i32_0 = arith.constant 0 : i32
    %c0_i32_1 = arith.constant 0 : i32
    return %arg0, %c0_i32, %c0_i32_0 : i32, i32, i32
  }
}

module attributes {stable_mosaic.version = 11 : i64} {
  func.func @_linear_kernel(%arg0: i32, %arg1: i32, %arg2: i32, %arg3: memref<16x32xbf16, #tpu.memory_space<vmem>>, %arg4: memref<1x128xi32, #tpu.memory_space<vmem>>, %arg5: memref<1x128xf32, #tpu.memory_space<vmem>>, %arg6: memref<16x128xbf16, #tpu.memory_space<vmem>>, %arg7: memref<16x128xf32, #tpu.memory_space<vmem>>) attributes {dimension_semantics = [#tpu.dimension_semantics<parallel>, #tpu.dimension_semantics<parallel>, #tpu.dimension_semantics<arbitrary>], iteration_bounds = array<i64: 1, 1, 1>, scalar_prefetch = 0 : i64, scratch_operands = 1 : i64, tpu.core_type = #tpu.core_type<tc>, window_params = [{transform_indices = @transform_0, window_bounds = array<i64: 16, 32>}, {transform_indices = @transform_1, window_bounds = array<i64: 1, 128>}, {transform_indices = @transform_2, window_bounds = array<i64: 1, 128>}, {transform_indices = @transform_3, window_bounds = array<i64: 16, 128>}]} {
    %c0_i32 = arith.constant 0 : i32
    %0 = arith.cmpi eq, %arg2, %c0_i32 : i32
    %1 = arith.extui %0 : i1 to i32
    %c0_i32_0 = arith.constant 0 : i32
    %2 = arith.cmpi ne, %1, %c0_i32_0 : i32
    scf.if %2 {
      %cst_13 = arith.constant 0.000000e+00 : f32
      %26 = vector.broadcast %cst_13 : f32 to vector<16x128xf32>
      %c0_14 = arith.constant 0 : index
      %c0_15 = arith.constant 0 : index
      %27 = vector.load %arg7[%c0_14, %c0_15] : memref<16x128xf32, #tpu.memory_space<vmem>>, vector<16x128xf32>
      tpu.vector_store %arg7[%c0_14, %c0_15], %26 {strides = array<i32>} : memref<16x128xf32, #tpu.memory_space<vmem>>, vector<16x128xf32>,
    } else {
    }
    %c0 = arith.constant 0 : index
    %c0_1 = arith.constant 0 : index
    %3 = vector.load %arg3[%c0, %c0_1] : memref<16x32xbf16, #tpu.memory_space<vmem>>, vector<16x32xbf16>
    %c0_2 = arith.constant 0 : index
    %c0_3 = arith.constant 0 : index
    %4 = vector.load %arg4[%c0_2, %c0_3] : memref<1x128xi32, #tpu.memory_space<vmem>>, vector<1x128xi32>
    %5 = tpu.iota {dimensions = array<i32: 1>} : vector<1x32x128xi32>
    %6 = vector.shape_cast %4 : vector<1x128xi32> to vector<1x1x128xi32>
    %7 = vector.shape_cast %6 : vector<1x1x128xi32> to vector<1x1x128xi32>
    %8 = vector.broadcast %7 : vector<1x1x128xi32> to vector<1x32x128xi32>
    %9 = arith.shrui %8, %5 : vector<1x32x128xi32>
    %c1_i32 = arith.constant 1 : i32
    %10 = vector.broadcast %c1_i32 : i32 to vector<1x32x128xi32>
    %11 = arith.andi %9, %10 : vector<1x32x128xi32>
    %c1_i32_4 = arith.constant 1 : i32
    %12 = vector.broadcast %c1_i32_4 : i32 to vector<1x32x128xi32>
    %13 = arith.cmpi eq, %11, %12 : vector<1x32x128xi32>
    %cst = arith.constant 1.000000e+00 : f32
    %cst_5 = arith.constant -1.000000e+00 : f32
    %14 = vector.broadcast %cst : f32 to vector<1x32x128xf32>
    %15 = vector.broadcast %cst_5 : f32 to vector<1x32x128xf32>
    %16 = arith.select %13, %14, %15 : vector<1x32x128xi1>, vector<1x32x128xf32>
    %17 = vector.shape_cast %16 : vector<1x32x128xf32> to vector<32x128xf32>
    %18 = arith.truncf %17 : vector<32x128xf32> to vector<32x128xbf16>
    %c0_6 = arith.constant 0 : index
    %c0_7 = arith.constant 0 : index
    %19 = vector.load %arg7[%c0_6, %c0_7] : memref<16x128xf32, #tpu.memory_space<vmem>>, vector<16x128xf32>
    %cst_8 = arith.constant dense<0.000000e+00> : vector<16x128xf32>
    %20 = tpu.matmul %3, %18, %cst_8 {dimension_numbers = #tpu.dot_dimension_numbers<[1], [0], [0], [1], [0, 0, 1, 1], [], []>} : vector<16x32xbf16>, vector<32x128xbf16>, vector<16x128xf32> -> vector<16x128xf32>
    %21 = arith.addf %19, %20 : vector<16x128xf32>
    %c0_9 = arith.constant 0 : index
    %c0_10 = arith.constant 0 : index
    %22 = vector.load %arg7[%c0_9, %c0_10] : memref<16x128xf32, #tpu.memory_space<vmem>>, vector<16x128xf32>
    tpu.vector_store %arg7[%c0_9, %c0_10], %21 {strides = array<i32>} : memref<16x128xf32, #tpu.memory_space<vmem>>, vector<16x128xf32>,
    %c0_i32_11 = arith.constant 0 : i32
    %23 = arith.cmpi eq, %arg2, %c0_i32_11 : i32
    %24 = arith.extui %23 : i1 to i32
    %c0_i32_12 = arith.constant 0 : i32
    %25 = arith.cmpi ne, %24, %c0_i32_12 : i32
    scf.if %25 {
      %c0_13 = arith.constant 0 : index
      %c0_14 = arith.constant 0 : index
      %26 = vector.load %arg7[%c0_13, %c0_14] : memref<16x128xf32, #tpu.memory_space<vmem>>, vector<16x128xf32>
      %c0_15 = arith.constant 0 : index
      %c0_16 = arith.constant 0 : index
      %27 = vector.load %arg5[%c0_15, %c0_16] : memref<1x128xf32, #tpu.memory_space<vmem>>, vector<1x128xf32>
      %28 = vector.broadcast %27 : vector<1x128xf32> to vector<16x128xf32>
      %29 = arith.addf %26, %28 : vector<16x128xf32>
      %cst_17 = arith.constant 5.000000e-01 : f32
      %30 = vector.broadcast %cst_17 : f32 to vector<16x128xf32>
      %31 = arith.mulf %30, %29 : vector<16x128xf32>
      %cst_18 = arith.constant 4.471500e-02 : f32
      %32 = vector.broadcast %cst_18 : f32 to vector<16x128xf32>
      %33 = arith.mulf %32, %29 : vector<16x128xf32>
      %34 = arith.mulf %33, %29 : vector<16x128xf32>
      %35 = arith.mulf %34, %29 : vector<16x128xf32>
      %36 = arith.addf %29, %35 : vector<16x128xf32>
      %cst_19 = arith.constant 0.797884583 : f32
      %37 = vector.broadcast %cst_19 : f32 to vector<16x128xf32>
      %38 = arith.mulf %37, %36 : vector<16x128xf32>
      %39 = math.tanh %38 : vector<16x128xf32>
      %cst_20 = arith.constant 1.000000e+00 : f32
      %40 = vector.broadcast %cst_20 : f32 to vector<16x128xf32>
      %41 = arith.addf %40, %39 : vector<16x128xf32>
      %42 = arith.mulf %31, %41 : vector<16x128xf32>
      %43 = arith.truncf %42 : vector<16x128xf32> to vector<16x128xbf16>
      %c0_21 = arith.constant 0 : index
      %c0_22 = arith.constant 0 : index
      %44 = vector.load %arg6[%c0_21, %c0_22] : memref<16x128xbf16, #tpu.memory_space<vmem>>, vector<16x128xbf16>
      tpu.vector_store %arg6[%c0_21, %c0_22], %43 {strides = array<i32>} : memref<16x128xbf16, #tpu.memory_space<vmem>>, vector<16x128xbf16>,
    } else {
    }
    return
  }
  func.func @transform_0(%arg0: i32, %arg1: i32, %arg2: i32) -> (i32, i32) {
    %c0_i32 = arith.constant 0 : i32
    return %arg0, %arg2 : i32, i32
  }
  func.func @transform_1(%arg0: i32, %arg1: i32, %arg2: i32) -> (i32, i32) {
    %c0_i32 = arith.constant 0 : i32
    return %arg2, %arg1 : i32, i32
  }
  func.func @transform_2(%arg0: i32, %arg1: i32, %arg2: i32) -> (i32, i32) {
    %c0_i32 = arith.constant 0 : i32
    %c0_i32_0 = arith.constant 0 : i32
    return %c0_i32, %arg1 : i32, i32
  }
  func.func @transform_3(%arg0: i32, %arg1: i32, %arg2: i32) -> (i32, i32) {
    %c0_i32 = arith.constant 0 : i32
    return %arg0, %arg1 : i32, i32
  }
}

module attributes {stable_mosaic.version = 11 : i64} {
  func.func @_linear_kernel(%arg0: i32, %arg1: i32, %arg2: i32, %arg3: memref<16x128xbf16, #tpu.memory_space<vmem>>, %arg4: memref<4x32xi32, #tpu.memory_space<vmem>>, %arg5: memref<1x32xf32, #tpu.memory_space<vmem>>, %arg6: memref<16x32xbf16, #tpu.memory_space<vmem>>, %arg7: memref<1x32xf32, #tpu.memory_space<vmem>>, %arg8: memref<1x32xf32, #tpu.memory_space<vmem>>, %arg9: memref<16x32xbf16, #tpu.memory_space<vmem>>, %arg10: memref<16x32xbf16, #tpu.memory_space<vmem>>, %arg11: memref<16x32xf32, #tpu.memory_space<vmem>>) attributes {dimension_semantics = [#tpu.dimension_semantics<parallel>, #tpu.dimension_semantics<parallel>, #tpu.dimension_semantics<arbitrary>], iteration_bounds = array<i64: 1, 1, 1>, scalar_prefetch = 0 : i64, scratch_operands = 1 : i64, tpu.core_type = #tpu.core_type<tc>, window_params = [{transform_indices = @transform_0, window_bounds = array<i64: 16, 128>}, {transform_indices = @transform_1, window_bounds = array<i64: 4, 32>}, {transform_indices = @transform_2, window_bounds = array<i64: 1, 32>}, {transform_indices = @transform_3, window_bounds = array<i64: 16, 32>}, {transform_indices = @transform_4, window_bounds = array<i64: 1, 32>}, {transform_indices = @transform_5, window_bounds = array<i64: 1, 32>}, {transform_indices = @transform_6, window_bounds = array<i64: 16, 32>}, {transform_indices = @transform_7, window_bounds = array<i64: 16, 32>}]} {
    %c0_i32 = arith.constant 0 : i32
    %0 = arith.cmpi eq, %arg2, %c0_i32 : i32
    %1 = arith.extui %0 : i1 to i32
    %c0_i32_0 = arith.constant 0 : i32
    %2 = arith.cmpi ne, %1, %c0_i32_0 : i32
    scf.if %2 {
      %cst_13 = arith.constant 0.000000e+00 : f32
      %26 = vector.broadcast %cst_13 : f32 to vector<16x32xf32>
      %c0_14 = arith.constant 0 : index
      %c0_15 = arith.constant 0 : index
      %27 = vector.load %arg11[%c0_14, %c0_15] : memref<16x32xf32, #tpu.memory_space<vmem>>, vector<16x32xf32>
      tpu.vector_store %arg11[%c0_14, %c0_15], %26 {strides = array<i32>} : memref<16x32xf32, #tpu.memory_space<vmem>>, vector<16x32xf32>,
    } else {
    }
    %c0 = arith.constant 0 : index
    %c0_1 = arith.constant 0 : index
    %3 = vector.load %arg3[%c0, %c0_1] : memref<16x128xbf16, #tpu.memory_space<vmem>>, vector<16x128xbf16>
    %c0_2 = arith.constant 0 : index
    %c0_3 = arith.constant 0 : index
    %4 = vector.load %arg4[%c0_2, %c0_3] : memref<4x32xi32, #tpu.memory_space<vmem>>, vector<4x32xi32>
    %5 = tpu.iota {dimensions = array<i32: 1>} : vector<4x32x32xi32>
    %6 = vector.shape_cast %4 : vector<4x32xi32> to vector<4x1x32xi32>
    %7 = vector.shape_cast %6 : vector<4x1x32xi32> to vector<4x1x32xi32>
    %8 = vector.broadcast %7 : vector<4x1x32xi32> to vector<4x32x32xi32>
    %9 = arith.shrui %8, %5 : vector<4x32x32xi32>
    %c1_i32 = arith.constant 1 : i32
    %10 = vector.broadcast %c1_i32 : i32 to vector<4x32x32xi32>
    %11 = arith.andi %9, %10 : vector<4x32x32xi32>
    %c1_i32_4 = arith.constant 1 : i32
    %12 = vector.broadcast %c1_i32_4 : i32 to vector<4x32x32xi32>
    %13 = arith.cmpi eq, %11, %12 : vector<4x32x32xi32>
    %cst = arith.constant 1.000000e+00 : f32
    %cst_5 = arith.constant -1.000000e+00 : f32
    %14 = vector.broadcast %cst : f32 to vector<4x32x32xf32>
    %15 = vector.broadcast %cst_5 : f32 to vector<4x32x32xf32>
    %16 = arith.select %13, %14, %15 : vector<4x32x32xi1>, vector<4x32x32xf32>
    %17 = vector.shape_cast %16 : vector<4x32x32xf32> to vector<128x32xf32>
    %18 = arith.truncf %17 : vector<128x32xf32> to vector<128x32xbf16>
    %c0_6 = arith.constant 0 : index
    %c0_7 = arith.constant 0 : index
    %19 = vector.load %arg11[%c0_6, %c0_7] : memref<16x32xf32, #tpu.memory_space<vmem>>, vector<16x32xf32>
    %cst_8 = arith.constant dense<0.000000e+00> : vector<16x32xf32>
    %20 = tpu.matmul %3, %18, %cst_8 {dimension_numbers = #tpu.dot_dimension_numbers<[1], [0], [0], [1], [0, 0, 1, 1], [], []>} : vector<16x128xbf16>, vector<128x32xbf16>, vector<16x32xf32> -> vector<16x32xf32>
    %21 = arith.addf %19, %20 : vector<16x32xf32>
    %c0_9 = arith.constant 0 : index
    %c0_10 = arith.constant 0 : index
    %22 = vector.load %arg11[%c0_9, %c0_10] : memref<16x32xf32, #tpu.memory_space<vmem>>, vector<16x32xf32>
    tpu.vector_store %arg11[%c0_9, %c0_10], %21 {strides = array<i32>} : memref<16x32xf32, #tpu.memory_space<vmem>>, vector<16x32xf32>,
    %c0_i32_11 = arith.constant 0 : i32
    %23 = arith.cmpi eq, %arg2, %c0_i32_11 : i32
    %24 = arith.extui %23 : i1 to i32
    %c0_i32_12 = arith.constant 0 : i32
    %25 = arith.cmpi ne, %24, %c0_i32_12 : i32
    scf.if %25 {
      %c0_13 = arith.constant 0 : index
      %c0_14 = arith.constant 0 : index
      %26 = vector.load %arg11[%c0_13, %c0_14] : memref<16x32xf32, #tpu.memory_space<vmem>>, vector<16x32xf32>
      %c0_15 = arith.constant 0 : index
      %c0_16 = arith.constant 0 : index
      %27 = vector.load %arg5[%c0_15, %c0_16] : memref<1x32xf32, #tpu.memory_space<vmem>>, vector<1x32xf32>
      %28 = vector.broadcast %27 : vector<1x32xf32> to vector<16x32xf32>
      %29 = arith.addf %26, %28 : vector<16x32xf32>
      %c0_17 = arith.constant 0 : index
      %c0_18 = arith.constant 0 : index
      %30 = vector.load %arg6[%c0_17, %c0_18] : memref<16x32xbf16, #tpu.memory_space<vmem>>, vector<16x32xbf16>
      %31 = arith.extf %30 : vector<16x32xbf16> to vector<16x32xf32>
      %32 = arith.addf %29, %31 : vector<16x32xf32>
      %33 = arith.truncf %32 : vector<16x32xf32> to vector<16x32xbf16>
      %c0_19 = arith.constant 0 : index
      %c0_20 = arith.constant 0 : index
      %34 = vector.load %arg9[%c0_19, %c0_20] : memref<16x32xbf16, #tpu.memory_space<vmem>>, vector<16x32xbf16>
      tpu.vector_store %arg9[%c0_19, %c0_20], %33 {strides = array<i32>} : memref<16x32xbf16, #tpu.memory_space<vmem>>, vector<16x32xbf16>,
      %cst_21 = arith.constant dense<0.000000e+00> : vector<16xf32>
      %35 = vector.multi_reduction <add>, %32, %cst_21 [1] : vector<16x32xf32> to vector<16xf32>
      %36 = vector.shape_cast %35 : vector<16xf32> to vector<16x1xf32>
      %cst_22 = arith.constant 3.200000e+01 : f32
      %37 = vector.broadcast %cst_22 : f32 to vector<16x1xf32>
      %38 = arith.divf %36, %37 : vector<16x1xf32>
      %39 = vector.broadcast %38 : vector<16x1xf32> to vector<16x32xf32>
      %40 = arith.subf %32, %39 : vector<16x32xf32>
      %41 = arith.mulf %40, %40 : vector<16x32xf32>
      %cst_23 = arith.constant dense<0.000000e+00> : vector<16xf32>
      %42 = vector.multi_reduction <add>, %41, %cst_23 [1] : vector<16x32xf32> to vector<16xf32>
      %43 = vector.shape_cast %42 : vector<16xf32> to vector<16x1xf32>
      %cst_24 = arith.constant 3.200000e+01 : f32
      %44 = vector.broadcast %cst_24 : f32 to vector<16x1xf32>
      %45 = arith.divf %43, %44 : vector<16x1xf32>
      %46 = vector.broadcast %38 : vector<16x1xf32> to vector<16x32xf32>
      %47 = arith.subf %32, %46 : vector<16x32xf32>
      %cst_25 = arith.constant 9.99999974E-6 : f32
      %48 = vector.broadcast %cst_25 : f32 to vector<16x1xf32>
      %49 = arith.addf %45, %48 : vector<16x1xf32>
      %50 = math.rsqrt %49 : vector<16x1xf32>
      %51 = vector.broadcast %50 : vector<16x1xf32> to vector<16x32xf32>
      %52 = arith.mulf %47, %51 : vector<16x32xf32>
      %c0_26 = arith.constant 0 : index
      %c0_27 = arith.constant 0 : index
      %53 = vector.load %arg7[%c0_26, %c0_27] : memref<1x32xf32, #tpu.memory_space<vmem>>, vector<1x32xf32>
      %54 = vector.broadcast %53 : vector<1x32xf32> to vector<16x32xf32>
      %55 = arith.mulf %52, %54 : vector<16x32xf32>
      %c0_28 = arith.constant 0 : index
      %c0_29 = arith.constant 0 : index
      %56 = vector.load %arg8[%c0_28, %c0_29] : memref<1x32xf32, #tpu.memory_space<vmem>>, vector<1x32xf32>
      %57 = vector.broadcast %56 : vector<1x32xf32> to vector<16x32xf32>
      %58 = arith.addf %55, %57 : vector<16x32xf32>
      %59 = arith.truncf %58 : vector<16x32xf32> to vector<16x32xbf16>
      %c0_30 = arith.constant 0 : index
      %c0_31 = arith.constant 0 : index
      %60 = vector.load %arg10[%c0_30, %c0_31] : memref<16x32xbf16, #tpu.memory_space<vmem>>, vector<16x32xbf16>
      tpu.vector_store %arg10[%c0_30, %c0_31], %59 {strides = array<i32>} : memref<16x32xbf16, #tpu.memory_space<vmem>>, vector<16x32xbf16>,
    } else {
    }
    return
  }
  func.func @transform_0(%arg0: i32, %arg1: i32, %arg2: i32) -> (i32, i32) {
    %c0_i32 = arith.constant 0 : i32
    return %arg0, %arg2 : i32, i32
  }
  func.func @transform_1(%arg0: i32, %arg1: i32, %arg2: i32) -> (i32, i32) {
    %c0_i32 = arith.constant 0 : i32
    return %arg2, %arg1 : i32, i32
  }
  func.func @transform_2(%arg0: i32, %arg1: i32, %arg2: i32) -> (i32, i32) {
    %c0_i32 = arith.constant 0 : i32
    %c0_i32_0 = arith.constant 0 : i32
    return %c0_i32, %arg1 : i32, i32
  }
  func.func @transform_3(%arg0: i32, %arg1: i32, %arg2: i32) -> (i32, i32) {
    %c0_i32 = arith.constant 0 : i32
    return %arg0, %arg1 : i32, i32
  }
  func.func @transform_4(%arg0: i32, %arg1: i32, %arg2: i32) -> (i32, i32) {
    %c0_i32 = arith.constant 0 : i32
    %c0_i32_0 = arith.constant 0 : i32
    return %c0_i32, %arg1 : i32, i32
  }
  func.func @transform_5(%arg0: i32, %arg1: i32, %arg2: i32) -> (i32, i32) {
    %c0_i32 = arith.constant 0 : i32
    %c0_i32_0 = arith.constant 0 : i32
    return %c0_i32, %arg1 : i32, i32
  }
  func.func @transform_6(%arg0: i32, %arg1: i32, %arg2: i32) -> (i32, i32) {
    %c0_i32 = arith.constant 0 : i32
    return %arg0, %arg1 : i32, i32
  }
  func.func @transform_7(%arg0: i32, %arg1: i32, %arg2: i32) -> (i32, i32) {
    %c0_i32 = arith.constant 0 : i32
    return %arg0, %arg1 : i32, i32
  }
}

module attributes {stable_mosaic.version = 11 : i64} {
  func.func @_linear_kernel(%arg0: i32, %arg1: i32, %arg2: i32, %arg3: memref<16x32xbf16, #tpu.memory_space<vmem>>, %arg4: memref<128x32xbf16, #tpu.memory_space<vmem>>, %arg5: memref<16x128xf32, #tpu.memory_space<vmem>>, %arg6: memref<16x128xf32, #tpu.memory_space<vmem>>) attributes {dimension_semantics = [#tpu.dimension_semantics<parallel>, #tpu.dimension_semantics<parallel>, #tpu.dimension_semantics<arbitrary>], iteration_bounds = array<i64: 1, 1, 1>, scalar_prefetch = 0 : i64, scratch_operands = 1 : i64, tpu.core_type = #tpu.core_type<tc>, window_params = [{transform_indices = @transform_0, window_bounds = array<i64: 16, 32>}, {transform_indices = @transform_1, window_bounds = array<i64: 128, 32>}, {transform_indices = @transform_2, window_bounds = array<i64: 16, 128>}]} {
    %c0_i32 = arith.constant 0 : i32
    %0 = arith.cmpi eq, %arg2, %c0_i32 : i32
    %1 = arith.extui %0 : i1 to i32
    %c0_i32_0 = arith.constant 0 : i32
    %2 = arith.cmpi ne, %1, %c0_i32_0 : i32
    scf.if %2 {
      %cst_10 = arith.constant 0.000000e+00 : f32
      %12 = vector.broadcast %cst_10 : f32 to vector<16x128xf32>
      %c0_11 = arith.constant 0 : index
      %c0_12 = arith.constant 0 : index
      %13 = vector.load %arg6[%c0_11, %c0_12] : memref<16x128xf32, #tpu.memory_space<vmem>>, vector<16x128xf32>
      tpu.vector_store %arg6[%c0_11, %c0_12], %12 {strides = array<i32>} : memref<16x128xf32, #tpu.memory_space<vmem>>, vector<16x128xf32>,
    } else {
    }
    %c0 = arith.constant 0 : index
    %c0_1 = arith.constant 0 : index
    %3 = vector.load %arg3[%c0, %c0_1] : memref<16x32xbf16, #tpu.memory_space<vmem>>, vector<16x32xbf16>
    %c0_2 = arith.constant 0 : index
    %c0_3 = arith.constant 0 : index
    %4 = vector.load %arg6[%c0_2, %c0_3] : memref<16x128xf32, #tpu.memory_space<vmem>>, vector<16x128xf32>
    %c0_4 = arith.constant 0 : index
    %c0_5 = arith.constant 0 : index
    %5 = vector.load %arg4[%c0_4, %c0_5] : memref<128x32xbf16, #tpu.memory_space<vmem>>, vector<128x32xbf16>
    %cst = arith.constant dense<0.000000e+00> : vector<16x128xf32>
    %6 = tpu.matmul %3, %5, %cst {dimension_numbers = #tpu.dot_dimension_numbers<[1], [1], [0], [0], [0, 0, 1, 0], [], []>} : vector<16x32xbf16>, vector<128x32xbf16>, vector<16x128xf32> -> vector<16x128xf32>
    %7 = arith.addf %4, %6 : vector<16x128xf32>
    %c0_6 = arith.constant 0 : index
    %c0_7 = arith.constant 0 : index
    %8 = vector.load %arg6[%c0_6, %c0_7] : memref<16x128xf32, #tpu.memory_space<vmem>>, vector<16x128xf32>
    tpu.vector_store %arg6[%c0_6, %c0_7], %7 {strides = array<i32>} : memref<16x128xf32, #tpu.memory_space<vmem>>, vector<16x128xf32>,
    %c0_i32_8 = arith.constant 0 : i32
    %9 = arith.cmpi eq, %arg2, %c0_i32_8 : i32
    %10 = arith.extui %9 : i1 to i32
    %c0_i32_9 = arith.constant 0 : i32
    %11 = arith.cmpi ne, %10, %c0_i32_9 : i32
    scf.if %11 {
      %c0_10 = arith.constant 0 : index
      %c0_11 = arith.constant 0 : index
      %12 = vector.load %arg6[%c0_10, %c0_11] : memref<16x128xf32, #tpu.memory_space<vmem>>, vector<16x128xf32>
      %c0_12 = arith.constant 0 : index
      %c0_13 = arith.constant 0 : index
      %13 = vector.load %arg5[%c0_12, %c0_13] : memref<16x128xf32, #tpu.memory_space<vmem>>, vector<16x128xf32>
      tpu.vector_store %arg5[%c0_12, %c0_13], %12 {strides = array<i32>} : memref<16x128xf32, #tpu.memory_space<vmem>>, vector<16x128xf32>,
    } else {
    }
    return
  }
  func.func @transform_0(%arg0: i32, %arg1: i32, %arg2: i32) -> (i32, i32) {
    %c0_i32 = arith.constant 0 : i32
    return %arg0, %arg2 : i32, i32
  }
  func.func @transform_1(%arg0: i32, %arg1: i32, %arg2: i32) -> (i32, i32) {
    %c0_i32 = arith.constant 0 : i32
    return %arg1, %arg2 : i32, i32
  }
  func.func @transform_2(%arg0: i32, %arg1: i32, %arg2: i32) -> (i32, i32) {
    %c0_i32 = arith.constant 0 : i32
    return %arg0, %arg1 : i32, i32
  }
}

</mosaic_0001>

<llo_original>
// kernel: forward.13
$region0: #{forward.13}
  #allocation0 [shape = 'u32[]', space=smem, size = 0x4, offset = 0x4, fixed_abs, tag = 'smem constant byte address 0x4 - core index']
  #allocation1 [shape = 'u32[144,128]{1,0:T(1,128)}', space=vmem, size = 0x12000, scoped, tag = 'internal scratch']
  #allocation2 [shape = 'f32[16,96]{1,0:T(8,128)}', space=vmem, size = 0x2000, scoped, tag = 'scratch operand']
  %s0 = inlined_call_operand.vmem [shape: bf16[16,32], index: 0, kind: input, shape index: {}]
  %s1 = inlined_call_operand.vmem [shape: s32[1,96], index: 1, kind: input, shape index: {}]
  %s2 = inlined_call_operand.vmem [shape: f32[1,96], index: 2, kind: input, shape index: {}]
  %s3 = inlined_call_operand.vmem [shape: bf16[16,96], index: 3, kind: output, shape index: {}]
  %s4 = sld [smem:[#allocation0]]
  $region30: #{forward.13} parent=0
    _
  %s6 = ssub.s32 1, %s4
  %s7 = scalar_select 0, %s6, %s4
  // Predicated region
  $region2: #{forward.13} parent=0 // pred_check
    _
  $region3: #{forward.13} parent=0 // pred_check_branch
    %9 = sbr.rel (0) target = $region5
  $region4: #{forward.13} parent=0 // pred_region
    _
  $region5: #{forward.13} parent=0 // pred_fallthru
    _
  // Predicated region
  $region6: #{forward.13} parent=0 // pred_check
    _
  $region7: #{forward.13} parent=0 // pred_check_branch
    %11 = sbr.rel (0) target = $region9
  $region8: #{forward.13} parent=0 // pred_region
    _
  $region9: #{forward.13} parent=0 // pred_fallthru
    _
  // Predicated region
  $region10: #{forward.13} parent=0 // pred_check
    _
  $region11: #{forward.13} parent=0 // pred_check_branch
    %13 = sbr.rel (0) target = $region13
  $region12: #{forward.13} parent=0 // pred_region
    _
  $region13: #{forward.13} parent=0 // pred_fallthru
    _
  %p15 = scmp.eq.s32.totalorder 0, 0
  // Predicated region
  $region14: #{forward.13} parent=0 // pred_check
    %p16 = pneg %p15
  $region15: #{forward.13} parent=0 // pred_check_branch
    %18 = sbr.rel (%p16) target = $region17
  $region16: #{forward.13} parent=0 // pred_region
    %vm19 = vcmask 785408
    %20 = vst.msk [vmem:[#allocation2] sm:$0xff] %vm19, 0.0
    %21 = vst.msk [vmem:[#allocation2 + $0x8] sm:$0xff] %vm19, 0.0
  $region17: #{forward.13} parent=0 // pred_fallthru
    _
  %v22 = vld [vmem:[%s0] sm:$0xf]
  %v23 = vld [vmem:[%s0 + $0x4] sm:$0xf]
  %v24 = vld [vmem:[%s1] sm:$0x1]
  %v25 = vlaneseq
  %v26 = vshrl.u32 %v25, 7
  %v27 = vadd.s32 %v26, 8
  %v28 = vadd.s32 %v26, 16
  %v29 = vadd.s32 %v26, 24
  %v30 = vlaneseq
  %v31 = vshrl.u32 %v30, 7
  %v32 = vsub.s32 0, %v31
  %v33 = vrot.slane %v24, %v32
  %v34 = vshrl.u32 %v33, %v26
  %v35 = vshrl.u32 %v33, %v27
  %v36 = vshrl.u32 %v33, %v28
  %v37 = vshrl.u32 %v33, %v29
  %v38 = vand.u32 %v34, 1
  %v39 = vand.u32 %v35, 1
  %v40 = vand.u32 %v36, 1
  %v41 = vand.u32 %v37, 1
  %vm42 = vcmp.eq.s32.totalorder %v38, 1
  %vm43 = vcmp.eq.s32.totalorder %v39, 1
  %vm44 = vcmp.eq.s32.totalorder %v40, 1
  %vm45 = vcmp.eq.s32.totalorder %v41, 1
  %v46 = vsel %vm42, 1.0, -1.0
  %v47 = vsel %vm43, 1.0, -1.0
  %v48 = vsel %vm44, 1.0, -1.0
  %v49 = vsel %vm45, 1.0, -1.0
  %v50 = vpack.c.bf16 %v47, %v46
  %v51 = vpack.c.bf16 %v49, %v48
  %v52 = vld [vmem:[#allocation2] sm:$0xff]
  %v53 = vld [vmem:[#allocation2 + $0x8] sm:$0xff]
  %v56 = vunpack.c.l.b16 %v22
  %v57 = vunpack.c.l.b16 %v23
  %v58 = vpack.c.b16 %v57, %v56
  %vm59 = vcmask 261120
  %v61 = vsel %vm59, %v58, 0
  %63 = vmatprep.subr.bf16.mxu0 0
  %64 = vmatpush1.bf16.msra.mxu0 %v50
  %65 = vmatprep.subr.bf16.mxu0 0
  %66 = vmatpush1.bf16.msra.mxu0 %v51
  %67 = vmatprep.subr.bf16.mxu0 0
  %68 = vmatpush1.bf16.msra.mxu0 0
  %69 = vmatprep.subr.bf16.mxu0 0
  %70 = vmatpush1.bf16.msra.mxu0 0
  %71 = vmatprep.subr.bf16.mxu0 0
  %72 = vmatpush1.bf16.msra.mxu0 0
  %73 = vmatprep.subr.bf16.mxu0 0
  %74 = vmatpush1.bf16.msra.mxu0 0
  %75 = vmatprep.subr.bf16.mxu0 0
  %76 = vmatpush1.bf16.msra.mxu0 0
  %77 = vmatprep.subr.bf16.mxu0 0
  %78 = vmatpush1.bf16.msra.mxu0 0
  %79 = vmatprep.subr.bf16.mxu0 0
  %80 = vmatpush1.bf16.msra.mxu0 0
  %81 = vmatprep.subr.bf16.mxu0 0
  %82 = vmatpush1.bf16.msra.mxu0 0
  %83 = vmatprep.subr.bf16.mxu0 0
  %84 = vmatpush1.bf16.msra.mxu0 0
  %85 = vmatprep.subr.bf16.mxu0 0
  %86 = vmatpush1.bf16.msra.mxu0 0
  %87 = vmatprep.subr.bf16.mxu0 0
  %88 = vmatpush1.bf16.msra.mxu0 0
  %89 = vmatprep.subr.bf16.mxu0 0
  %90 = vmatpush1.bf16.msra.mxu0 0
  %91 = vmatprep.subr.bf16.mxu0 0
  %92 = vmatpush1.bf16.msra.mxu0 0
  %93 = vmatprep.subr.bf16.mxu0 0
  %94 = vmatpush1.bf16.msra.mxu0 0
  %95 = vmatprep.mubr.bf16.mxu0 0
  %96 = vmatmul.mubr.bf16.gmra.mrb[0].mxu0 %v61
  %v97 = vpop.f32.mrb[0].mxu0
  %v98 = vadd.f32 0.0, %v97
  %v99 = vpop.f32.mrb[0].mxu0
  %v100 = vpop.f32.mrb[0].mxu0
  %v101 = vadd.f32 0.0, %v100
  %v102 = vpop.f32.mrb[0].mxu0
  %103 = vdwg.mxu0
  %v104 = vadd.f32 %v52, %v98
  %v105 = vadd.f32 %v53, %v101
  %vm106 = vcmask 785408
  %107 = vst.msk [vmem:[#allocation2] sm:$0xff] %vm106, %v104
  %108 = vst.msk [vmem:[#allocation2 + $0x8] sm:$0xff] %vm106, %v105
  // Predicated region
  $region18: #{forward.13} parent=0 // pred_check
    %p109 = pneg %p15
  $region19: #{forward.13} parent=0 // pred_check_branch
    %111 = sbr.rel (%p109) target = $region21
  $region20: #{forward.13} parent=0 // pred_region
    %v112 = vld [vmem:[#allocation2] sm:$0xff]
    %v113 = vld [vmem:[#allocation2 + $0x8] sm:$0xff]
    %v114 = vld [vmem:[%s2] sm:$0x1]
    %v116 = vlaneseq
    %v117 = vshrl.u32 %v116, 7
    %v118 = vsub.s32 0, %v117
    %v119 = vrot.slane %v114, %v118
    %v121 = vadd.f32 %v112, %v119
    %v122 = vadd.f32 %v113, %v119
    %v123 = vpack.c.bf16 %v122, %v121
    %v125 = vunpack.c.l.b16 %v123
    %v126 = vunpack.c.h.b16 %v123
    %v127 = vpack.c.b16 %v125, %v125
    %v128 = vpack.c.b16 %v126, %v126
    %vm131 = vcmask 781312
    %132 = vst.msk [vmem:[%s3] sm:$0xf] %vm131, %v127
    %133 = vst.msk [vmem:[%s3 + $0x4] sm:$0xf] %vm131, %v128
  $region21: #{forward.13} parent=0 // pred_fallthru
    _
  // Predicated region
  $region22: #{forward.13} parent=0 // pred_check
    _
  $region23: #{forward.13} parent=0 // pred_check_branch
    %135 = sbr.rel (0) target = $region25
  $region24: #{forward.13} parent=0 // pred_region
    _
  $region25: #{forward.13} parent=0 // pred_fallthru
    _
  // Predicated region
  $region26: #{forward.13} parent=0 // pred_check
    _
  $region27: #{forward.13} parent=0 // pred_check_branch
    %137 = sbr.rel (0) target = $region29
  $region28: #{forward.13} parent=0 // pred_region
    _
  $region29: #{forward.13} parent=0 // pred_fallthru
    _

// kernel: forward.12
$region0: #{forward.12}
  #allocation0 [shape = 'u32[]', space=smem, size = 0x4, offset = 0x4, fixed_abs, tag = 'smem constant byte address 0x4 - core index']
  #allocation1 [shape = 'u32[144,128]{1,0:T(1,128)}', space=vmem, size = 0x12000, scoped, tag = 'internal scratch']
  %s0 = inlined_call_operand.vmem [shape: bf16[16,32], index: 0, kind: input, shape index: {}]
  %s1 = inlined_call_operand.vmem [shape: f32[1,32], index: 1, kind: input, shape index: {}]
  %s2 = inlined_call_operand.vmem [shape: f32[1,32], index: 2, kind: input, shape index: {}]
  %s3 = inlined_call_operand.vmem [shape: bf16[16,32], index: 3, kind: output, shape index: {}]
  %s4 = sld [smem:[#allocation0]]
  $region22: #{forward.12} parent=0
    _
  %s6 = ssub.s32 1, %s4
  %s7 = scalar_select 0, %s6, %s4
  // Predicated region
  $region2: #{forward.12} parent=0 // pred_check
    _
  $region3: #{forward.12} parent=0 // pred_check_branch
    %9 = sbr.rel (0) target = $region5
  $region4: #{forward.12} parent=0 // pred_region
    _
  $region5: #{forward.12} parent=0 // pred_fallthru
    _
  // Predicated region
  $region6: #{forward.12} parent=0 // pred_check
    _
  $region7: #{forward.12} parent=0 // pred_check_branch
    %11 = sbr.rel (0) target = $region9
  $region8: #{forward.12} parent=0 // pred_region
    _
  $region9: #{forward.12} parent=0 // pred_fallthru
    _
  // Predicated region
  $region10: #{forward.12} parent=0 // pred_check
    _
  $region11: #{forward.12} parent=0 // pred_check_branch
    %13 = sbr.rel (0) target = $region13
  $region12: #{forward.12} parent=0 // pred_region
    _
  $region13: #{forward.12} parent=0 // pred_fallthru
    _
  %v14 = vld [vmem:[%s0] sm:$0xf]
  %v15 = vld [vmem:[%s0 + $0x4] sm:$0xf]
  %v16 = vunpack.c.l.bf16 %v14
  %v17 = vunpack.c.l.bf16 %v15
  %vm18 = vcmask 261120
  %v19 = vsel %vm18, %v16, 0.0
  %20 = vadd.xlane.f32.xlu0 %v19
  %v21 = vpop.xlane.xlu0 %20
  %v22 = vsel %vm18, %v17, 0.0
  %23 = vadd.xlane.f32.xlu0 %v22
  %v24 = vpop.xlane.xlu0 %23
  %v25 = vrcp.pop 32.0
  %v26 = vmul.f32 %v21, %v25
  %v27 = vmul.f32 %v24, %v25
  %v28 = vsub.f32 %v16, %v26
  %v29 = vsub.f32 %v17, %v27
  %v30 = vmul.f32 %v28, %v28
  %v31 = vmul.f32 %v29, %v29
  %v32 = vsel %vm18, %v30, 0.0
  %33 = vadd.xlane.f32.xlu0 %v32
  %v34 = vpop.xlane.xlu0 %33
  %v35 = vsel %vm18, %v31, 0.0
  %36 = vadd.xlane.f32.xlu0 %v35
  %v37 = vpop.xlane.xlu0 %36
  %v38 = vmul.f32 %v34, %v25
  %v39 = vmul.f32 %v37, %v25
  %v40 = vadd.f32 %v38, 1e-05
  %v41 = vadd.f32 %v39, 1e-05
  %v42 = vrsqrt.pop %v40
  %v43 = vrsqrt.pop %v41
  %v44 = vmul.f32 %v28, %v42
  %v45 = vmul.f32 %v29, %v43
  %v46 = vld [vmem:[%s1] sm:$0x1]
  %v48 = vlaneseq
  %v49 = vshrl.u32 %v48, 7
  %v50 = vsub.s32 0, %v49
  %v51 = vrot.slane %v46, %v50
  %v53 = vmul.f32 %v44, %v51
  %v54 = vmul.f32 %v45, %v51
  %v55 = vld [vmem:[%s2] sm:$0x1]
  %v57 = vlaneseq
  %v58 = vshrl.u32 %v57, 7
  %v59 = vsub.s32 0, %v58
  %v60 = vrot.slane %v55, %v59
  %v62 = vadd.f32 %v53, %v60
  %v63 = vadd.f32 %v54, %v60
  %v64 = vpack.c.bf16 %v63, %v62
  %v66 = vunpack.c.l.b16 %v64
  %v67 = vunpack.c.h.b16 %v64
  %v68 = vpack.c.b16 %v66, %v66
  %v69 = vpack.c.b16 %v67, %v67
  %vm72 = vcmask 257024
  %73 = vst.msk [vmem:[%s3] sm:$0xf] %vm72, %v68
  %74 = vst.msk [vmem:[%s3 + $0x4] sm:$0xf] %vm72, %v69
  // Predicated region
  $region14: #{forward.12} parent=0 // pred_check
    _
  $region15: #{forward.12} parent=0 // pred_check_branch
    %76 = sbr.rel (0) target = $region17
  $region16: #{forward.12} parent=0 // pred_region
    _
  $region17: #{forward.12} parent=0 // pred_fallthru
    _
  // Predicated region
  $region18: #{forward.12} parent=0 // pred_check
    _
  $region19: #{forward.12} parent=0 // pred_check_branch
    %78 = sbr.rel (0) target = $region21
  $region20: #{forward.12} parent=0 // pred_region
    _
  $region21: #{forward.12} parent=0 // pred_fallthru
    _

// kernel: forward.14
$region0: #{forward.14}
  #allocation0 [shape = 'u32[]', space=smem, size = 0x4, offset = 0x4, fixed_abs, tag = 'smem constant byte address 0x4 - core index']
  #allocation1 [shape = 'u32[144,128]{1,0:T(1,128)}', space=vmem, size = 0x12000, scoped, tag = 'internal scratch']
  %s0 = inlined_call_operand.vmem [shape: bf16[2,8,96], index: 0, kind: input, shape index: {}]
  %s1 = inlined_call_operand.vmem [shape: bf16[2,8,32], index: 1, kind: output, shape index: {}]
  %s2 = sld [smem:[#allocation0]]
  $region37: #{forward.14} parent=0
    _
  %s4 = ssub.s32 1, %s2
  %s5 = scalar_select 0, %s4, %s2
  loop: start=0, step=1, limit=4
  $region2: #{forward.14} parent=0 // loop_pre_header
    _
  $region3: #{forward.14} parent=0 // loop_header
    %s7 = sphi 0, %s11
    %p8 = scmp.ge.s32.totalorder %s7, 4
    %s17 = sphi 0, %s19
    %s20 = sphi 0, %s17
    %s21 = sphi 0, %s20
    %s37 = sphi 0, %s21
    %s43 = sphi 0, %s45
    %s46 = sphi 0, %s43
    %s47 = sphi 0, %s46
    %s63 = sphi 0, %s47
  $region4: #{forward.14} parent=0 // loop_header_branch
    %10 = sbr.rel (%p8) target = $region8
  $region5: #{forward.14} parent=0 // loop_body
    %s12 = ssub.s32 %s7, 1
    %s13 = ssub.s32 %s7, 2
    %s14 = sadd.s32 %s7, 1
    %s15 = ssub.s32 %s7, %s14
    %p16 = scmp.eq.s32.totalorder %s15, 0
    %s18 = sadd.s32 %s17, 1
    %s19 = scalar_select %p16, %s17, %s18
    %p22 = pneg %p16
    %p23 = scmp.eq.s32.totalorder %s7, 1
    %p24 = por %p22, %p23
    %p25 = scmp.ne.s32.totalorder %s17, %s20
    %p26 = scmp.eq.s32.totalorder %s7, 0
    %p27 = por %p25, %p26
    %p28 = scmp.ne.s32.totalorder %s17, %s20
    %p29 = scmp.eq.s32.totalorder %s12, 1
    %p30 = por %p28, %p29
    %p31 = scmp.ne.s32.totalorder %s20, %s21
    %p32 = scmp.eq.s32.totalorder %s12, 0
    %p33 = por %p31, %p32
    %p34 = scmp.ne.s32.totalorder %s20, %s21
    %p35 = scmp.eq.s32.totalorder %s13, 1
    %p36 = por %p34, %p35
    %p38 = scmp.ne.s32.totalorder %s21, %s37
    %p39 = scmp.eq.s32.totalorder %s13, 0
    %p40 = por %p38, %p39
    %s41 = ssub.s32 %s7, %s14
    %p42 = scmp.eq.s32.totalorder %s41, 0
    %s44 = sadd.s32 %s43, 1
    %s45 = scalar_select %p42, %s43, %s44
    %p48 = pneg %p42
    %p49 = scmp.eq.s32.totalorder %s7, 1
    %p50 = por %p48, %p49
    %p51 = scmp.ne.s32.totalorder %s43, %s46
    %p52 = scmp.eq.s32.totalorder %s7, 0
    %p53 = por %p51, %p52
    %p54 = scmp.ne.s32.totalorder %s43, %s46
    %p55 = scmp.eq.s32.totalorder %s12, 1
    %p56 = por %p54, %p55
    %p57 = scmp.ne.s32.totalorder %s46, %s47
    %p58 = scmp.eq.s32.totalorder %s12, 0
    %p59 = por %p57, %p58
    %p60 = scmp.ne.s32.totalorder %s46, %s47
    %p61 = scmp.eq.s32.totalorder %s13, 1
    %p62 = por %p60, %p61
    %p64 = scmp.ne.s32.totalorder %s47, %s63
    %p65 = scmp.eq.s32.totalorder %s13, 0
    %p66 = por %p64, %p65
    %p67 = scmp.le.s32.totalorder 1, %s7
    %p68 = scmp.lt.s32.totalorder %s7, 3
    %p69 = pnand %p67, %p68
    %p70 = pneg %p69
    // Predicated region
    $region9: #{forward.14} parent=5 // pred_check
      _
    $region10: #{forward.14} parent=5 // pred_check_branch
      %72 = sbr.rel (%p69) target = $region12
    $region11: #{forward.14} parent=5 // pred_region
      %s73 = ssub.s32 %s7, 1
    $region12: #{forward.14} parent=5 // pred_fallthru
      _
    %p74 = scmp.lt.s32.totalorder %s7, 2
    // Predicated region
    $region13: #{forward.14} parent=5 // pred_check
      %p75 = pneg %p74
    $region14: #{forward.14} parent=5 // pred_check_branch
      %77 = sbr.rel (%p75) target = $region16
    $region15: #{forward.14} parent=5 // pred_region
      // Predicated region
      $region17: #{forward.14} parent=15 // pred_check
        %p78 = pneg %p27
      $region18: #{forward.14} parent=15 // pred_check_branch
        %80 = sbr.rel (%p78) target = $region20
      $region19: #{forward.14} parent=15 // pred_region
        %p81 = scmp.lt.s32.totalorder %s7, 1
        %s82 = scalar_select %p81, %s7, 1
        %s83 = smul.addr %s82, 4
        %s84 = scalar_lea.vmem %s0, %s83
      $region20: #{forward.14} parent=15 // pred_fallthru
        _
    $region16: #{forward.14} parent=5 // pred_fallthru
      _
    %p85 = scmp.le.s32.totalorder 1, %s7
    %p86 = scmp.lt.s32.totalorder %s7, 3
    %p87 = pnand %p85, %p86
    %p88 = pneg %p87
    // Predicated region
    $region21: #{forward.14} parent=5 // pred_check
      _
    $region22: #{forward.14} parent=5 // pred_check_branch
      %90 = sbr.rel (%p87) target = $region24
    $region23: #{forward.14} parent=5 // pred_region
      %s91 = ssub.s32 %s7, 1
      %p92 = scmp.lt.s32.totalorder %s12, 1
      %s93 = scalar_select %p92, %s12, 1
      %s94 = smul.addr %s93, 4
      %s95 = scalar_lea.vmem %s0, %s94
      %p96 = pneg %p33
      %p97 = pneg %p30
      %p98 = pneg %p59
      %p99 = pneg %p56
      %p100 = scmp.lt.s32.totalorder %s12, 1
      %s101 = scalar_select %p100, %s12, 1
      %s102 = smul.addr %s101, 4
      %s103 = scalar_lea.vmem %s1, %s102
      %p104 = scmp.lt.s32.totalorder %s12, 1
      %s105 = scalar_select %p104, %s12, 1
      %s106 = smul.addr %s105, 4
      %s107 = scalar_lea.vmem %s0, %s106
      %p108 = scmp.lt.s32.totalorder %s12, 1
      %s109 = scalar_select %p108, %s12, 1
      %s110 = smul.addr %s109, 4
      %s111 = scalar_lea.vmem %s1, %s110
      %v114 = vlaneseq
      %v115 = vshrl.u32 %v114, 7
      %v116 = vlaneseq
      %v117 = vand.u32 %v116, 127
      %vm118 = vcmp.ge.s32.totalorder %v115, %v117
      %v119 = vld [vmem:[%s107] sm:$0xf]
      %v120 = vmul.bf16 %v119, 1048592000
      %v122 = vunpack.c.l.b16 %v119
      %v123 = vpack.c.b16 %v122, %v122
      %124 = vrot.lane.b32.xlu0 %v123, 96
      %v125 = vpop.permute.xlu0 %124
      %vm126 = vcmask 130048
      %v128 = vsel %vm126, %v120, 0
      %v131 = vsel %vm126, %v125, 0
      %133 = vmatprep.subr.bf16.mxu0 0
      %134 = vmatpush1.bf16.xpose.msra.mxu0 %v131
      %135 = vmatprep.subr.bf16.mxu0 0
      %136 = vmatpush1.bf16.xpose.msra.mxu0 0
      %137 = vmatprep.subr.bf16.mxu0 0
      %138 = vmatpush1.bf16.xpose.msra.mxu0 0
      %139 = vmatprep.subr.bf16.mxu0 0
      %140 = vmatpush1.bf16.xpose.msra.mxu0 0
      %141 = vmatprep.subr.bf16.mxu0 0
      %142 = vmatpush1.bf16.xpose.msra.mxu0 0
      %143 = vmatprep.subr.bf16.mxu0 0
      %144 = vmatpush1.bf16.xpose.msra.mxu0 0
      %145 = vmatprep.subr.bf16.mxu0 0
      %146 = vmatpush1.bf16.xpose.msra.mxu0 0
      %147 = vmatprep.subr.bf16.mxu0 0
      %148 = vmatpush1.bf16.xpose.msra.mxu0 0
      %149 = vmatprep.subr.bf16.mxu0 0
      %150 = vmatpush1.bf16.xpose.msra.mxu0 0
      %151 = vmatprep.subr.bf16.mxu0 0
      %152 = vmatpush1.bf16.xpose.msra.mxu0 0
      %153 = vmatprep.subr.bf16.mxu0 0
      %154 = vmatpush1.bf16.xpose.msra.mxu0 0
      %155 = vmatprep.subr.bf16.mxu0 0
      %156 = vmatpush1.bf16.xpose.msra.mxu0 0
      %157 = vmatprep.subr.bf16.mxu0 0
      %158 = vmatpush1.bf16.xpose.msra.mxu0 0
      %159 = vmatprep.subr.bf16.mxu0 0
      %160 = vmatpush1.bf16.xpose.msra.mxu0 0
      %161 = vmatprep.subr.bf16.mxu0 0
      %162 = vmatpush1.bf16.xpose.msra.mxu0 0
      %163 = vmatprep.subr.bf16.mxu0 0
      %164 = vmatpush1.bf16.xpose.msra.mxu0 0
      %165 = vmatprep.mubr.bf16.mxu0 0
      %166 = vmatmul.mubr.bf16.gmra.mrb[0].mxu0 %v128
      %v167 = vpop.f32.mrb[0].mxu0
      %v168 = vadd.f32 0.0, %v167
      %v169 = vpop.f32.mrb[0].mxu0
      %v170 = vpop.f32.mrb[0].mxu0
      %v171 = vpop.f32.mrb[0].mxu0
      %172 = vdwg.mxu0
      %v173 = vsel %vm118, %v168, -1e+30
      %vm174 = vcmask 64512
      %v175 = vsel %vm174, %v173, -inf
      %176 = vmax.xlane.f32.xlu0 %v175
      %v177 = vpop.xlane.xlu0 %176
      %v178 = vsub.f32 %v173, %v177
      %v179 = vmul.f32 %v178, 1.442695
      %v180 = vpow.pop %v179
      %v181 = vsel %vm174, %v180, 0.0
      %182 = vadd.xlane.f32.xlu0 %v181
      %v183 = vpop.xlane.xlu0 %182
      %v184 = vpack.c.bf16 %v180, %v180
      %185 = vrot.lane.b32.xlu0 %v123, 64
      %v186 = vpop.permute.xlu0 %185
      %v188 = vsel %vm174, %v184, 0
      %vm190 = vcmask 1043456
      %v192 = vsel %vm190, %v186, 0
      %194 = vmatprep.subr.bf16.mxu0 0
      %195 = vmatpush1.bf16.msra.mxu0 %v192
      %196 = vmatprep.subr.bf16.mxu0 0
      %197 = vmatpush1.bf16.msra.mxu0 0
      %198 = vmatprep.subr.bf16.mxu0 0
      %199 = vmatpush1.bf16.msra.mxu0 0
      %200 = vmatprep.subr.bf16.mxu0 0
      %201 = vmatpush1.bf16.msra.mxu0 0
      %202 = vmatprep.subr.bf16.mxu0 0
      %203 = vmatpush1.bf16.msra.mxu0 0
      %204 = vmatprep.subr.bf16.mxu0 0
      %205 = vmatpush1.bf16.msra.mxu0 0
      %206 = vmatprep.subr.bf16.mxu0 0
      %207 = vmatpush1.bf16.msra.mxu0 0
      %208 = vmatprep.subr.bf16.mxu0 0
      %209 = vmatpush1.bf16.msra.mxu0 0
      %210 = vmatprep.subr.bf16.mxu0 0
      %211 = vmatpush1.bf16.msra.mxu0 0
      %212 = vmatprep.subr.bf16.mxu0 0
      %213 = vmatpush1.bf16.msra.mxu0 0
      %214 = vmatprep.subr.bf16.mxu0 0
      %215 = vmatpush1.bf16.msra.mxu0 0
      %216 = vmatprep.subr.bf16.mxu0 0
      %217 = vmatpush1.bf16.msra.mxu0 0
      %218 = vmatprep.subr.bf16.mxu0 0
      %219 = vmatpush1.bf16.msra.mxu0 0
      %220 = vmatprep.subr.bf16.mxu0 0
      %221 = vmatpush1.bf16.msra.mxu0 0
      %222 = vmatprep.subr.bf16.mxu0 0
      %223 = vmatpush1.bf16.msra.mxu0 0
      %224 = vmatprep.subr.bf16.mxu0 0
      %225 = vmatpush1.bf16.msra.mxu0 0
      %226 = vmatprep.mubr.bf16.mxu0 0
      %227 = vmatmul.mubr.bf16.gmra.mrb[0].mxu0 %v188
      %v228 = vpop.f32.mrb[0].mxu0
      %v229 = vadd.f32 0.0, %v228
      %v230 = vpop.f32.mrb[0].mxu0
      %v231 = vpop.f32.mrb[0].mxu0
      %v232 = vpop.f32.mrb[0].mxu0
      %233 = vdwg.mxu0
      %v234 = vrcp.pop %v183
      %v235 = vmul.f32 %v229, %v234
      %v236 = vpack.c.bf16 %v235, %v235
      %vm237 = vcmask 125952
      %238 = vst.msk [vmem:[%s111] sm:$0xf] %vm237, %v236
      %v239 = vld [vmem:[%s107] sm:$0xf]
      %v240 = vmul.bf16 %v239, 1048592000
      %v242 = vunpack.c.l.b16 %v240
      %v243 = vpack.c.b16 %v242, %v242
      %244 = vrot.lane.b32.xlu0 %v243, 112
      %v245 = vpop.permute.xlu0 %244
      %v247 = vunpack.c.l.b16 %v239
      %v248 = vpack.c.b16 %v247, %v247
      %249 = vrot.lane.b32.xlu0 %v248, 80
      %v250 = vpop.permute.xlu0 %249
      %v252 = vsel %vm126, %v245, 0
      %v255 = vsel %vm126, %v250, 0
      %257 = vmatprep.subr.bf16.mxu0 0
      %258 = vmatpush1.bf16.xpose.msra.mxu0 %v255
      %259 = vmatprep.subr.bf16.mxu0 0
      %260 = vmatpush1.bf16.xpose.msra.mxu0 0
      %261 = vmatprep.subr.bf16.mxu0 0
      %262 = vmatpush1.bf16.xpose.msra.mxu0 0
      %263 = vmatprep.subr.bf16.mxu0 0
      %264 = vmatpush1.bf16.xpose.msra.mxu0 0
      %265 = vmatprep.subr.bf16.mxu0 0
      %266 = vmatpush1.bf16.xpose.msra.mxu0 0
      %267 = vmatprep.subr.bf16.mxu0 0
      %268 = vmatpush1.bf16.xpose.msra.mxu0 0
      %269 = vmatprep.subr.bf16.mxu0 0
      %270 = vmatpush1.bf16.xpose.msra.mxu0 0
      %271 = vmatprep.subr.bf16.mxu0 0
      %272 = vmatpush1.bf16.xpose.msra.mxu0 0
      %273 = vmatprep.subr.bf16.mxu0 0
      %274 = vmatpush1.bf16.xpose.msra.mxu0 0
      %275 = vmatprep.subr.bf16.mxu0 0
      %276 = vmatpush1.bf16.xpose.msra.mxu0 0
      %277 = vmatprep.subr.bf16.mxu0 0
      %278 = vmatpush1.bf16.xpose.msra.mxu0 0
      %279 = vmatprep.subr.bf16.mxu0 0
      %280 = vmatpush1.bf16.xpose.msra.mxu0 0
      %281 = vmatprep.subr.bf16.mxu0 0
      %282 = vmatpush1.bf16.xpose.msra.mxu0 0
      %283 = vmatprep.subr.bf16.mxu0 0
      %284 = vmatpush1.bf16.xpose.msra.mxu0 0
      %285 = vmatprep.subr.bf16.mxu0 0
      %286 = vmatpush1.bf16.xpose.msra.mxu0 0
      %287 = vmatprep.subr.bf16.mxu0 0
      %288 = vmatpush1.bf16.xpose.msra.mxu0 0
      %289 = vmatprep.mubr.bf16.mxu0 0
      %290 = vmatmul.mubr.bf16.gmra.mrb[0].mxu0 %v252
      %v291 = vpop.f32.mrb[0].mxu0
      %v292 = vadd.f32 0.0, %v291
      %v293 = vpop.f32.mrb[0].mxu0
      %v294 = vpop.f32.mrb[0].mxu0
      %v295 = vpop.f32.mrb[0].mxu0
      %296 = vdwg.mxu0
      %v297 = vsel %vm118, %v292, -1e+30
      %v298 = vsel %vm174, %v297, -inf
      %299 = vmax.xlane.f32.xlu0 %v298
      %v300 = vpop.xlane.xlu0 %299
      %v301 = vsub.f32 %v297, %v300
      %v302 = vmul.f32 %v301, 1.442695
      %v303 = vpow.pop %v302
      %v304 = vsel %vm174, %v303, 0.0
      %305 = vadd.xlane.f32.xlu0 %v304
      %v306 = vpop.xlane.xlu0 %305
      %v307 = vpack.c.bf16 %v303, %v303
      %308 = vrot.lane.b32.xlu0 %v248, 48
      %v309 = vpop.permute.xlu0 %308
      %v311 = vsel %vm174, %v307, 0
      %v314 = vsel %vm190, %v309, 0
      %316 = vmatprep.subr.bf16.mxu0 0
      %317 = vmatpush1.bf16.msra.mxu0 %v314
      %318 = vmatprep.subr.bf16.mxu0 0
      %319 = vmatpush1.bf16.msra.mxu0 0
      %320 = vmatprep.subr.bf16.mxu0 0
      %321 = vmatpush1.bf16.msra.mxu0 0
      %322 = vmatprep.subr.bf16.mxu0 0
      %323 = vmatpush1.bf16.msra.mxu0 0
      %324 = vmatprep.subr.bf16.mxu0 0
      %325 = vmatpush1.bf16.msra.mxu0 0
      %326 = vmatprep.subr.bf16.mxu0 0
      %327 = vmatpush1.bf16.msra.mxu0 0
      %328 = vmatprep.subr.bf16.mxu0 0
      %329 = vmatpush1.bf16.msra.mxu0 0
      %330 = vmatprep.subr.bf16.mxu0 0
      %331 = vmatpush1.bf16.msra.mxu0 0
      %332 = vmatprep.subr.bf16.mxu0 0
      %333 = vmatpush1.bf16.msra.mxu0 0
      %334 = vmatprep.subr.bf16.mxu0 0
      %335 = vmatpush1.bf16.msra.mxu0 0
      %336 = vmatprep.subr.bf16.mxu0 0
      %337 = vmatpush1.bf16.msra.mxu0 0
      %338 = vmatprep.subr.bf16.mxu0 0
      %339 = vmatpush1.bf16.msra.mxu0 0
      %340 = vmatprep.subr.bf16.mxu0 0
      %341 = vmatpush1.bf16.msra.mxu0 0
      %342 = vmatprep.subr.bf16.mxu0 0
      %343 = vmatpush1.bf16.msra.mxu0 0
      %344 = vmatprep.subr.bf16.mxu0 0
      %345 = vmatpush1.bf16.msra.mxu0 0
      %346 = vmatprep.subr.bf16.mxu0 0
      %347 = vmatpush1.bf16.msra.mxu0 0
      %348 = vmatprep.mubr.bf16.mxu0 0
      %349 = vmatmul.mubr.bf16.gmra.mrb[0].mxu0 %v311
      %v350 = vpop.f32.mrb[0].mxu0
      %v351 = vadd.f32 0.0, %v350
      %v352 = vpop.f32.mrb[0].mxu0
      %v353 = vpop.f32.mrb[0].mxu0
      %v354 = vpop.f32.mrb[0].mxu0
      %355 = vdwg.mxu0
      %v356 = vrcp.pop %v306
      %v357 = vmul.f32 %v351, %v356
      %v358 = vpack.c.bf16 %v357, %v357
      %v360 = vunpack.c.l.b16 %v358
      %v361 = vpack.c.b16 %v360, %v360
      %362 = vrot.lane.b32.xlu0 %v361, 16
      %v363 = vpop.permute.xlu0 %362
      %vm365 = vcmask 257152
      %366 = vst.msk [vmem:[%s111] sm:$0xf] %vm365, %v363
      %p367 = scmp.lt.s32.totalorder %s12, 1
      %s368 = scalar_select %p367, %s12, 1
      %s369 = smul.addr %s368, 4
      %s370 = scalar_lea.vmem %s1, %s369
      // Predicated region
      $region25: #{forward.14} parent=23 // pred_check
        %p371 = pneg %p56
      $region26: #{forward.14} parent=23 // pred_check_branch
        %373 = sbr.rel (%p371) target = $region28
      $region27: #{forward.14} parent=23 // pred_region
        _
      $region28: #{forward.14} parent=23 // pred_fallthru
        _
    $region24: #{forward.14} parent=5 // pred_fallthru
      _
    %p374 = scmp.le.s32.totalorder 2, %s7
    // Predicated region
    $region29: #{forward.14} parent=5 // pred_check
      %p375 = pneg %p374
    $region30: #{forward.14} parent=5 // pred_check_branch
      %377 = sbr.rel (%p375) target = $region32
    $region31: #{forward.14} parent=5 // pred_region
      %s378 = ssub.s32 %s7, 2
      // Predicated region
      $region33: #{forward.14} parent=31 // pred_check
        %p379 = pneg %p62
      $region34: #{forward.14} parent=31 // pred_check_branch
        %381 = sbr.rel (%p379) target = $region36
      $region35: #{forward.14} parent=31 // pred_region
        %p382 = scmp.lt.s32.totalorder %s13, 1
        %s383 = scalar_select %p382, %s13, 1
        %s384 = smul.addr %s383, 4
        %s385 = scalar_lea.vmem %s1, %s384
      $region36: #{forward.14} parent=31 // pred_fallthru
        _
    $region32: #{forward.14} parent=5 // pred_fallthru
      _
  $region6: #{forward.14} parent=0 // loop_footer
    %s11 = sadd.s32 1, %s7
  $region7: #{forward.14} parent=0 // loop_footer_branch
    %6 = sbr.rel target = $region3
  $region8: #{forward.14} parent=0 // loop_exit
    _

// kernel: forward.15
$region0: #{forward.15}
  #allocation0 [shape = 'u32[]', space=smem, size = 0x4, offset = 0x4, fixed_abs, tag = 'smem constant byte address 0x4 - core index']
  #allocation1 [shape = 'u32[144,128]{1,0:T(1,128)}', space=vmem, size = 0x12000, scoped, tag = 'internal scratch']
  #allocation2 [shape = 'f32[16,32]{1,0:T(8,128)}', space=vmem, size = 0x2000, scoped, tag = 'scratch operand']
  %s0 = inlined_call_operand.vmem [shape: bf16[16,32], index: 0, kind: input, shape index: {}]
  %s1 = inlined_call_operand.vmem [shape: s32[1,32], index: 1, kind: input, shape index: {}]
  %s2 = inlined_call_operand.vmem [shape: f32[1,32], index: 2, kind: input, shape index: {}]
  %s3 = inlined_call_operand.vmem [shape: bf16[16,32], index: 3, kind: input, shape index: {}, may-alias: {3,6}]
  %s4 = inlined_call_operand.vmem [shape: f32[1,32], index: 4, kind: input, shape index: {}]
  %s5 = inlined_call_operand.vmem [shape: f32[1,32], index: 5, kind: input, shape index: {}]
  %s6 = inlined_call_operand.vmem [shape: bf16[16,32], index: 6, kind: output, shape index: {0}, may-alias: {3,6}]
  %s7 = inlined_call_operand.vmem [shape: bf16[16,32], index: 7, kind: output, shape index: {1}]
  %8 = xla_tuple %s6, %s7
  %s9 = sld [smem:[#allocation0]]
  $region50: #{forward.15} parent=0
    _
  %s11 = ssub.s32 1, %s9
  %s12 = scalar_select 0, %s11, %s9
  // Predicated region
  $region2: #{forward.15} parent=0 // pred_check
    _
  $region3: #{forward.15} parent=0 // pred_check_branch
    %14 = sbr.rel (0) target = $region5
  $region4: #{forward.15} parent=0 // pred_region
    _
  $region5: #{forward.15} parent=0 // pred_fallthru
    _
  // Predicated region
  $region6: #{forward.15} parent=0 // pred_check
    _
  $region7: #{forward.15} parent=0 // pred_check_branch
    %16 = sbr.rel (0) target = $region9
  $region8: #{forward.15} parent=0 // pred_region
    _
  $region9: #{forward.15} parent=0 // pred_fallthru
    _
  // Predicated region
  $region10: #{forward.15} parent=0 // pred_check
    _
  $region11: #{forward.15} parent=0 // pred_check_branch
    %18 = sbr.rel (0) target = $region13
  $region12: #{forward.15} parent=0 // pred_region
    _
  $region13: #{forward.15} parent=0 // pred_fallthru
    _
  // Predicated region
  $region14: #{forward.15} parent=0 // pred_check
    _
  $region15: #{forward.15} parent=0 // pred_check_branch
    %20 = sbr.rel (0) target = $region17
  $region16: #{forward.15} parent=0 // pred_region
    _
  $region17: #{forward.15} parent=0 // pred_fallthru
    _
  // Predicated region
  $region18: #{forward.15} parent=0 // pred_check
    _
  $region19: #{forward.15} parent=0 // pred_check_branch
    %22 = sbr.rel (0) target = $region21
  $region20: #{forward.15} parent=0 // pred_region
    _
  $region21: #{forward.15} parent=0 // pred_fallthru
    _
  // Predicated region
  $region22: #{forward.15} parent=0 // pred_check
    _
  $region23: #{forward.15} parent=0 // pred_check_branch
    %24 = sbr.rel (0) target = $region25
  $region24: #{forward.15} parent=0 // pred_region
    _
  $region25: #{forward.15} parent=0 // pred_fallthru
    _
  %p26 = scmp.eq.s32.totalorder 0, 0
  // Predicated region
  $region26: #{forward.15} parent=0 // pred_check
    %p27 = pneg %p26
  $region27: #{forward.15} parent=0 // pred_check_branch
    %29 = sbr.rel (%p27) target = $region29
  $region28: #{forward.15} parent=0 // pred_region
    %vm30 = vcmask 261120
    %31 = vst.msk [vmem:[#allocation2] sm:$0xff] %vm30, 0.0
    %32 = vst.msk [vmem:[#allocation2 + $0x8] sm:$0xff] %vm30, 0.0
  $region29: #{forward.15} parent=0 // pred_fallthru
    _
  %v33 = vld [vmem:[%s0] sm:$0xf]
  %v34 = vld [vmem:[%s0 + $0x4] sm:$0xf]
  %v35 = vld [vmem:[%s1] sm:$0x1]
  %v36 = vlaneseq
  %v37 = vshrl.u32 %v36, 7
  %v38 = vadd.s32 %v37, 8
  %v39 = vadd.s32 %v37, 16
  %v40 = vadd.s32 %v37, 24
  %v41 = vlaneseq
  %v42 = vshrl.u32 %v41, 7
  %v43 = vsub.s32 0, %v42
  %v44 = vrot.slane %v35, %v43
  %v45 = vshrl.u32 %v44, %v37
  %v46 = vshrl.u32 %v44, %v38
  %v47 = vshrl.u32 %v44, %v39
  %v48 = vshrl.u32 %v44, %v40
  %v49 = vand.u32 %v45, 1
  %v50 = vand.u32 %v46, 1
  %v51 = vand.u32 %v47, 1
  %v52 = vand.u32 %v48, 1
  %vm53 = vcmp.eq.s32.totalorder %v49, 1
  %vm54 = vcmp.eq.s32.totalorder %v50, 1
  %vm55 = vcmp.eq.s32.totalorder %v51, 1
  %vm56 = vcmp.eq.s32.totalorder %v52, 1
  %v57 = vsel %vm53, 1.0, -1.0
  %v58 = vsel %vm54, 1.0, -1.0
  %v59 = vsel %vm55, 1.0, -1.0
  %v60 = vsel %vm56, 1.0, -1.0
  %v61 = vpack.c.bf16 %v58, %v57
  %v62 = vpack.c.bf16 %v60, %v59
  %v63 = vld [vmem:[#allocation2] sm:$0xff]
  %v64 = vld [vmem:[#allocation2 + $0x8] sm:$0xff]
  %v67 = vunpack.c.l.b16 %v33
  %v68 = vunpack.c.l.b16 %v34
  %v69 = vpack.c.b16 %v68, %v67
  %vm70 = vcmask 261120
  %v72 = vsel %vm70, %v69, 0
  %74 = vmatprep.subr.bf16.mxu0 0
  %75 = vmatpush1.bf16.msra.mxu0 %v61
  %76 = vmatprep.subr.bf16.mxu0 0
  %77 = vmatpush1.bf16.msra.mxu0 %v62
  %78 = vmatprep.subr.bf16.mxu0 0
  %79 = vmatpush1.bf16.msra.mxu0 0
  %80 = vmatprep.subr.bf16.mxu0 0
  %81 = vmatpush1.bf16.msra.mxu0 0
  %82 = vmatprep.subr.bf16.mxu0 0
  %83 = vmatpush1.bf16.msra.mxu0 0
  %84 = vmatprep.subr.bf16.mxu0 0
  %85 = vmatpush1.bf16.msra.mxu0 0
  %86 = vmatprep.subr.bf16.mxu0 0
  %87 = vmatpush1.bf16.msra.mxu0 0
  %88 = vmatprep.subr.bf16.mxu0 0
  %89 = vmatpush1.bf16.msra.mxu0 0
  %90 = vmatprep.subr.bf16.mxu0 0
  %91 = vmatpush1.bf16.msra.mxu0 0
  %92 = vmatprep.subr.bf16.mxu0 0
  %93 = vmatpush1.bf16.msra.mxu0 0
  %94 = vmatprep.subr.bf16.mxu0 0
  %95 = vmatpush1.bf16.msra.mxu0 0
  %96 = vmatprep.subr.bf16.mxu0 0
  %97 = vmatpush1.bf16.msra.mxu0 0
  %98 = vmatprep.subr.bf16.mxu0 0
  %99 = vmatpush1.bf16.msra.mxu0 0
  %100 = vmatprep.subr.bf16.mxu0 0
  %101 = vmatpush1.bf16.msra.mxu0 0
  %102 = vmatprep.subr.bf16.mxu0 0
  %103 = vmatpush1.bf16.msra.mxu0 0
  %104 = vmatprep.subr.bf16.mxu0 0
  %105 = vmatpush1.bf16.msra.mxu0 0
  %106 = vmatprep.mubr.bf16.mxu0 0
  %107 = vmatmul.mubr.bf16.gmra.mrb[0].mxu0 %v72
  %v108 = vpop.f32.mrb[0].mxu0
  %v109 = vadd.f32 0.0, %v108
  %v110 = vpop.f32.mrb[0].mxu0
  %v111 = vpop.f32.mrb[0].mxu0
  %v112 = vadd.f32 0.0, %v111
  %v113 = vpop.f32.mrb[0].mxu0
  %114 = vdwg.mxu0
  %v115 = vadd.f32 %v63, %v109
  %v116 = vadd.f32 %v64, %v112
  %117 = vst.msk [vmem:[#allocation2] sm:$0xff] %vm70, %v115
  %118 = vst.msk [vmem:[#allocation2 + $0x8] sm:$0xff] %vm70, %v116
  // Predicated region
  $region30: #{forward.15} parent=0 // pred_check
    %p119 = pneg %p26
  $region31: #{forward.15} parent=0 // pred_check_branch
    %121 = sbr.rel (%p119) target = $region33
  $region32: #{forward.15} parent=0 // pred_region
    %v122 = vld [vmem:[#allocation2] sm:$0xff]
    %v123 = vld [vmem:[#allocation2 + $0x8] sm:$0xff]
    %v124 = vld [vmem:[%s2] sm:$0x1]
    %v126 = vlaneseq
    %v127 = vshrl.u32 %v126, 7
    %v128 = vsub.s32 0, %v127
    %v129 = vrot.slane %v124, %v128
    %v131 = vadd.f32 %v122, %v129
    %v132 = vadd.f32 %v123, %v129
    %v133 = vld [vmem:[%s3] sm:$0xf]
    %v134 = vld [vmem:[%s3 + $0x4] sm:$0xf]
    %v135 = vunpack.c.l.bf16 %v133
    %v136 = vunpack.c.l.bf16 %v134
    %v137 = vadd.f32 %v131, %v135
    %v138 = vadd.f32 %v132, %v136
    %v139 = vpack.c.bf16 %v138, %v137
    %v141 = vunpack.c.l.b16 %v139
    %v142 = vunpack.c.h.b16 %v139
    %v143 = vpack.c.b16 %v141, %v141
    %v144 = vpack.c.b16 %v142, %v142
    %vm147 = vcmask 257024
    %148 = vst.msk [vmem:[%s6] sm:$0xf] %vm147, %v143
    %149 = vst.msk [vmem:[%s6 + $0x4] sm:$0xf] %vm147, %v144
    %v150 = vsel %vm70, %v137, 0.0
    %151 = vadd.xlane.f32.xlu0 %v150
    %v152 = vpop.xlane.xlu0 %151
    %v153 = vsel %vm70, %v138, 0.0
    %154 = vadd.xlane.f32.xlu0 %v153
    %v155 = vpop.xlane.xlu0 %154
    %v156 = vrcp.pop 32.0
    %v157 = vmul.f32 %v152, %v156
    %v158 = vmul.f32 %v155, %v156
    %v159 = vsub.f32 %v137, %v157
    %v160 = vsub.f32 %v138, %v158
    %v161 = vmul.f32 %v159, %v159
    %v162 = vmul.f32 %v160, %v160
    %v163 = vsel %vm70, %v161, 0.0
    %164 = vadd.xlane.f32.xlu0 %v163
    %v165 = vpop.xlane.xlu0 %164
    %v166 = vsel %vm70, %v162, 0.0
    %167 = vadd.xlane.f32.xlu0 %v166
    %v168 = vpop.xlane.xlu0 %167
    %v169 = vmul.f32 %v165, %v156
    %v170 = vmul.f32 %v168, %v156
    %v171 = vadd.f32 %v169, 1e-05
    %v172 = vadd.f32 %v170, 1e-05
    %v173 = vrsqrt.pop %v171
    %v174 = vrsqrt.pop %v172
    %v175 = vmul.f32 %v159, %v173
    %v176 = vmul.f32 %v160, %v174
    %v177 = vld [vmem:[%s4] sm:$0x1]
    %v179 = vlaneseq
    %v180 = vshrl.u32 %v179, 7
    %v181 = vsub.s32 0, %v180
    %v182 = vrot.slane %v177, %v181
    %v184 = vmul.f32 %v175, %v182
    %v185 = vmul.f32 %v176, %v182
    %v186 = vld [vmem:[%s5] sm:$0x1]
    %v188 = vlaneseq
    %v189 = vshrl.u32 %v188, 7
    %v190 = vsub.s32 0, %v189
    %v191 = vrot.slane %v186, %v190
    %v193 = vadd.f32 %v184, %v191
    %v194 = vadd.f32 %v185, %v191
    %v195 = vpack.c.bf16 %v194, %v193
    %v197 = vunpack.c.l.b16 %v195
    %v198 = vunpack.c.h.b16 %v195
    %v199 = vpack.c.b16 %v197, %v197
    %v200 = vpack.c.b16 %v198, %v198
    %203 = vst.msk [vmem:[%s7] sm:$0xf] %vm147, %v199
    %204 = vst.msk [vmem:[%s7 + $0x4] sm:$0xf] %vm147, %v200
  $region33: #{forward.15} parent=0 // pred_fallthru
    _
  // Predicated region
  $region34: #{forward.15} parent=0 // pred_check
    _
  $region35: #{forward.15} parent=0 // pred_check_branch
    %206 = sbr.rel (0) target = $region37
  $region36: #{forward.15} parent=0 // pred_region
    _
  $region37: #{forward.15} parent=0 // pred_fallthru
    _
  // Predicated region
  $region38: #{forward.15} parent=0 // pred_check
    _
  $region39: #{forward.15} parent=0 // pred_check_branch
    %208 = sbr.rel (0) target = $region41
  $region40: #{forward.15} parent=0 // pred_region
    _
  $region41: #{forward.15} parent=0 // pred_fallthru
    _
  // Predicated region
  $region42: #{forward.15} parent=0 // pred_check
    _
  $region43: #{forward.15} parent=0 // pred_check_branch
    %210 = sbr.rel (0) target = $region45
  $region44: #{forward.15} parent=0 // pred_region
    _
  $region45: #{forward.15} parent=0 // pred_fallthru
    _
  // Predicated region
  $region46: #{forward.15} parent=0 // pred_check
    _
  $region47: #{forward.15} parent=0 // pred_check_branch
    %212 = sbr.rel (0) target = $region49
  $region48: #{forward.15} parent=0 // pred_region
    _
  $region49: #{forward.15} parent=0 // pred_fallthru
    _

// kernel: forward.23
$region0: #{forward.23}
  #allocation0 [shape = 'u32[]', space=smem, size = 0x4, offset = 0x4, fixed_abs, tag = 'smem constant byte address 0x4 - core index']
  #allocation1 [shape = 'u32[144,128]{1,0:T(1,128)}', space=vmem, size = 0x12000, scoped, tag = 'internal scratch']
  #allocation2 [shape = 'f32[16,128]{1,0:T(8,128)}', space=vmem, size = 0x2000, scoped, tag = 'scratch operand']
  %s0 = inlined_call_operand.vmem [shape: bf16[16,32], index: 0, kind: input, shape index: {}]
  %s1 = inlined_call_operand.vmem [shape: bf16[128,32], index: 1, kind: input, shape index: {}]
  %s2 = inlined_call_operand.vmem [shape: f32[16,128], index: 2, kind: output, shape index: {}]
  %s3 = sld [smem:[#allocation0]]
  $region26: #{forward.23} parent=0
    _
  %s5 = ssub.s32 1, %s3
  %s6 = scalar_select 0, %s5, %s3
  // Predicated region
  $region2: #{forward.23} parent=0 // pred_check
    _
  $region3: #{forward.23} parent=0 // pred_check_branch
    %8 = sbr.rel (0) target = $region5
  $region4: #{forward.23} parent=0 // pred_region
    _
  $region5: #{forward.23} parent=0 // pred_fallthru
    _
  // Predicated region
  $region6: #{forward.23} parent=0 // pred_check
    _
  $region7: #{forward.23} parent=0 // pred_check_branch
    %10 = sbr.rel (0) target = $region9
  $region8: #{forward.23} parent=0 // pred_region
    _
  $region9: #{forward.23} parent=0 // pred_fallthru
    _
  %p12 = scmp.eq.s32.totalorder 0, 0
  // Predicated region
  $region10: #{forward.23} parent=0 // pred_check
    %p13 = pneg %p12
  $region11: #{forward.23} parent=0 // pred_check_branch
    %15 = sbr.rel (%p13) target = $region13
  $region12: #{forward.23} parent=0 // pred_region
    %16 = vst [vmem:[#allocation2] sm:$0xff] 0.0
    %17 = vst [vmem:[#allocation2 + $0x8] sm:$0xff] 0.0
  $region13: #{forward.23} parent=0 // pred_fallthru
    _
  %v18 = vld [vmem:[%s0] sm:$0xf]
  %v19 = vld [vmem:[%s0 + $0x4] sm:$0xf]
  %v20 = vld [vmem:[#allocation2] sm:$0xff]
  %v21 = vld [vmem:[#allocation2 + $0x8] sm:$0xff]
  %v22 = vld [vmem:[%s1] sm:$0xf]
  %v23 = vld [vmem:[%s1 + $0x4] sm:$0xf]
  %v24 = vld [vmem:[%s1 + $0x8] sm:$0xf]
  %v25 = vld [vmem:[%s1 + $0xc] sm:$0xf]
  %v26 = vld [vmem:[%s1 + $0x10] sm:$0xf]
  %v27 = vld [vmem:[%s1 + $0x14] sm:$0xf]
  %v28 = vld [vmem:[%s1 + $0x18] sm:$0xf]
  %v29 = vld [vmem:[%s1 + $0x1c] sm:$0xf]
  %v30 = vld [vmem:[%s1 + $0x20] sm:$0xf]
  %v31 = vld [vmem:[%s1 + $0x24] sm:$0xf]
  %v32 = vld [vmem:[%s1 + $0x28] sm:$0xf]
  %v33 = vld [vmem:[%s1 + $0x2c] sm:$0xf]
  %v34 = vld [vmem:[%s1 + $0x30] sm:$0xf]
  %v35 = vld [vmem:[%s1 + $0x34] sm:$0xf]
  %v36 = vld [vmem:[%s1 + $0x38] sm:$0xf]
  %v37 = vld [vmem:[%s1 + $0x3c] sm:$0xf]
  %v40 = vunpack.c.l.b16 %v18
  %v41 = vunpack.c.l.b16 %v19
  %v42 = vpack.c.b16 %v41, %v40
  %v59 = vunpack.c.l.b16 %v22
  %v60 = vunpack.c.l.b16 %v23
  %v61 = vunpack.c.l.b16 %v24
  %v62 = vunpack.c.l.b16 %v25
  %v63 = vunpack.c.l.b16 %v26
  %v64 = vunpack.c.l.b16 %v27
  %v65 = vunpack.c.l.b16 %v28
  %v66 = vunpack.c.l.b16 %v29
  %v67 = vunpack.c.l.b16 %v30
  %v68 = vunpack.c.l.b16 %v31
  %v69 = vunpack.c.l.b16 %v32
  %v70 = vunpack.c.l.b16 %v33
  %v71 = vunpack.c.l.b16 %v34
  %v72 = vunpack.c.l.b16 %v35
  %v73 = vunpack.c.l.b16 %v36
  %v74 = vunpack.c.l.b16 %v37
  %v75 = vpack.c.b16 %v60, %v59
  %v76 = vpack.c.b16 %v62, %v61
  %v77 = vpack.c.b16 %v64, %v63
  %v78 = vpack.c.b16 %v66, %v65
  %v79 = vpack.c.b16 %v68, %v67
  %v80 = vpack.c.b16 %v70, %v69
  %v81 = vpack.c.b16 %v72, %v71
  %v82 = vpack.c.b16 %v74, %v73
  %vm83 = vcmask 261120
  %v85 = vsel %vm83, %v42, 0
  %v88 = vsel %vm83, %v75, 0
  %v91 = vsel %vm83, %v76, 0
  %v94 = vsel %vm83, %v77, 0
  %v97 = vsel %vm83, %v78, 0
  %v100 = vsel %vm83, %v79, 0
  %v103 = vsel %vm83, %v80, 0
  %v106 = vsel %vm83, %v81, 0
  %v109 = vsel %vm83, %v82, 0
  %111 = vmatprep.subr.bf16.mxu0 0
  %112 = vmatpush1.bf16.xpose.msra.mxu0 %v88
  %113 = vmatprep.subr.bf16.mxu0 0
  %114 = vmatpush1.bf16.xpose.msra.mxu0 %v91
  %115 = vmatprep.subr.bf16.mxu0 0
  %116 = vmatpush1.bf16.xpose.msra.mxu0 %v94
  %117 = vmatprep.subr.bf16.mxu0 0
  %118 = vmatpush1.bf16.xpose.msra.mxu0 %v97
  %119 = vmatprep.subr.bf16.mxu0 0
  %120 = vmatpush1.bf16.xpose.msra.mxu0 %v100
  %121 = vmatprep.subr.bf16.mxu0 0
  %122 = vmatpush1.bf16.xpose.msra.mxu0 %v103
  %123 = vmatprep.subr.bf16.mxu0 0
  %124 = vmatpush1.bf16.xpose.msra.mxu0 %v106
  %125 = vmatprep.subr.bf16.mxu0 0
  %126 = vmatpush1.bf16.xpose.msra.mxu0 %v109
  %127 = vmatprep.subr.bf16.mxu0 0
  %128 = vmatpush1.bf16.xpose.msra.mxu0 0
  %129 = vmatprep.subr.bf16.mxu0 0
  %130 = vmatpush1.bf16.xpose.msra.mxu0 0
  %131 = vmatprep.subr.bf16.mxu0 0
  %132 = vmatpush1.bf16.xpose.msra.mxu0 0
  %133 = vmatprep.subr.bf16.mxu0 0
  %134 = vmatpush1.bf16.xpose.msra.mxu0 0
  %135 = vmatprep.subr.bf16.mxu0 0
  %136 = vmatpush1.bf16.xpose.msra.mxu0 0
  %137 = vmatprep.subr.bf16.mxu0 0
  %138 = vmatpush1.bf16.xpose.msra.mxu0 0
  %139 = vmatprep.subr.bf16.mxu0 0
  %140 = vmatpush1.bf16.xpose.msra.mxu0 0
  %141 = vmatprep.subr.bf16.mxu0 0
  %142 = vmatpush1.bf16.xpose.msra.mxu0 0
  %143 = vmatprep.mubr.bf16.mxu0 0
  %144 = vmatmul.mubr.bf16.gmra.mrb[0].mxu0 %v85
  %v145 = vpop.f32.mrb[0].mxu0
  %v146 = vadd.f32 0.0, %v145
  %v147 = vpop.f32.mrb[0].mxu0
  %v148 = vpop.f32.mrb[0].mxu0
  %v149 = vadd.f32 0.0, %v148
  %v150 = vpop.f32.mrb[0].mxu0
  %151 = vdwg.mxu0
  %v152 = vadd.f32 %v20, %v146
  %v153 = vadd.f32 %v21, %v149
  %154 = vst [vmem:[#allocation2] sm:$0xff] %v152
  %155 = vst [vmem:[#allocation2 + $0x8] sm:$0xff] %v153
  // Predicated region
  $region14: #{forward.23} parent=0 // pred_check
    %p156 = pneg %p12
  $region15: #{forward.23} parent=0 // pred_check_branch
    %158 = sbr.rel (%p156) target = $region17
  $region16: #{forward.23} parent=0 // pred_region
    %v159 = vld [vmem:[#allocation2] sm:$0xff]
    %v160 = vld [vmem:[#allocation2 + $0x8] sm:$0xff]
    %161 = vst [vmem:[%s2] sm:$0xff] %v159
    %162 = vst [vmem:[%s2 + $0x8] sm:$0xff] %v160
  $region17: #{forward.23} parent=0 // pred_fallthru
    _
  // Predicated region
  $region18: #{forward.23} parent=0 // pred_check
    _
  $region19: #{forward.23} parent=0 // pred_check_branch
    %164 = sbr.rel (0) target = $region21
  $region20: #{forward.23} parent=0 // pred_region
    _
  $region21: #{forward.23} parent=0 // pred_fallthru
    _
  // Predicated region
  $region22: #{forward.23} parent=0 // pred_check
    _
  $region23: #{forward.23} parent=0 // pred_check_branch
    %166 = sbr.rel (0) target = $region25
  $region24: #{forward.23} parent=0 // pred_region
    _
  $region25: #{forward.23} parent=0 // pred_fallthru
    _

// kernel: forward.16
$region0: #{forward.16}
  #allocation0 [shape = 'u32[]', space=smem, size = 0x4, offset = 0x4, fixed_abs, tag = 'smem constant byte address 0x4 - core index']
  #allocation1 [shape = 'u32[144,128]{1,0:T(1,128)}', space=vmem, size = 0x12000, scoped, tag = 'internal scratch']
  #allocation2 [shape = 'f32[16,128]{1,0:T(8,128)}', space=vmem, size = 0x2000, scoped, tag = 'scratch operand']
  %s0 = inlined_call_operand.vmem [shape: bf16[16,32], index: 0, kind: input, shape index: {}]
  %s1 = inlined_call_operand.vmem [shape: s32[1,128], index: 1, kind: input, shape index: {}]
  %s2 = inlined_call_operand.vmem [shape: f32[1,128], index: 2, kind: input, shape index: {}]
  %s3 = inlined_call_operand.vmem [shape: bf16[16,128], index: 3, kind: output, shape index: {}]
  %s4 = sld [smem:[#allocation0]]
  $region30: #{forward.16} parent=0
    _
  %s6 = ssub.s32 1, %s4
  %s7 = scalar_select 0, %s6, %s4
  // Predicated region
  $region2: #{forward.16} parent=0 // pred_check
    _
  $region3: #{forward.16} parent=0 // pred_check_branch
    %9 = sbr.rel (0) target = $region5
  $region4: #{forward.16} parent=0 // pred_region
    _
  $region5: #{forward.16} parent=0 // pred_fallthru
    _
  // Predicated region
  $region6: #{forward.16} parent=0 // pred_check
    _
  $region7: #{forward.16} parent=0 // pred_check_branch
    %11 = sbr.rel (0) target = $region9
  $region8: #{forward.16} parent=0 // pred_region
    _
  $region9: #{forward.16} parent=0 // pred_fallthru
    _
  // Predicated region
  $region10: #{forward.16} parent=0 // pred_check
    _
  $region11: #{forward.16} parent=0 // pred_check_branch
    %13 = sbr.rel (0) target = $region13
  $region12: #{forward.16} parent=0 // pred_region
    _
  $region13: #{forward.16} parent=0 // pred_fallthru
    _
  %p15 = scmp.eq.s32.totalorder 0, 0
  // Predicated region
  $region14: #{forward.16} parent=0 // pred_check
    %p16 = pneg %p15
  $region15: #{forward.16} parent=0 // pred_check_branch
    %18 = sbr.rel (%p16) target = $region17
  $region16: #{forward.16} parent=0 // pred_region
    %19 = vst [vmem:[#allocation2] sm:$0xff] 0.0
    %20 = vst [vmem:[#allocation2 + $0x8] sm:$0xff] 0.0
  $region17: #{forward.16} parent=0 // pred_fallthru
    _
  %v21 = vld [vmem:[%s0] sm:$0xf]
  %v22 = vld [vmem:[%s0 + $0x4] sm:$0xf]
  %v23 = vld [vmem:[%s1] sm:$0x1]
  %v24 = vlaneseq
  %v25 = vshrl.u32 %v24, 7
  %v26 = vadd.s32 %v25, 8
  %v27 = vadd.s32 %v25, 16
  %v28 = vadd.s32 %v25, 24
  %v29 = vlaneseq
  %v30 = vshrl.u32 %v29, 7
  %v31 = vsub.s32 0, %v30
  %v32 = vrot.slane %v23, %v31
  %v33 = vshrl.u32 %v32, %v25
  %v34 = vshrl.u32 %v32, %v26
  %v35 = vshrl.u32 %v32, %v27
  %v36 = vshrl.u32 %v32, %v28
  %v37 = vand.u32 %v33, 1
  %v38 = vand.u32 %v34, 1
  %v39 = vand.u32 %v35, 1
  %v40 = vand.u32 %v36, 1
  %vm41 = vcmp.eq.s32.totalorder %v37, 1
  %vm42 = vcmp.eq.s32.totalorder %v38, 1
  %vm43 = vcmp.eq.s32.totalorder %v39, 1
  %vm44 = vcmp.eq.s32.totalorder %v40, 1
  %v45 = vsel %vm41, 1.0, -1.0
  %v46 = vsel %vm42, 1.0, -1.0
  %v47 = vsel %vm43, 1.0, -1.0
  %v48 = vsel %vm44, 1.0, -1.0
  %v49 = vpack.c.bf16 %v46, %v45
  %v50 = vpack.c.bf16 %v48, %v47
  %v51 = vld [vmem:[#allocation2] sm:$0xff]
  %v52 = vld [vmem:[#allocation2 + $0x8] sm:$0xff]
  %v55 = vunpack.c.l.b16 %v21
  %v56 = vunpack.c.l.b16 %v22
  %v57 = vpack.c.b16 %v56, %v55
  %vm58 = vcmask 261120
  %v60 = vsel %vm58, %v57, 0
  %62 = vmatprep.subr.bf16.mxu0 0
  %63 = vmatpush1.bf16.msra.mxu0 %v49
  %64 = vmatprep.subr.bf16.mxu0 0
  %65 = vmatpush1.bf16.msra.mxu0 %v50
  %66 = vmatprep.subr.bf16.mxu0 0
  %67 = vmatpush1.bf16.msra.mxu0 0
  %68 = vmatprep.subr.bf16.mxu0 0
  %69 = vmatpush1.bf16.msra.mxu0 0
  %70 = vmatprep.subr.bf16.mxu0 0
  %71 = vmatpush1.bf16.msra.mxu0 0
  %72 = vmatprep.subr.bf16.mxu0 0
  %73 = vmatpush1.bf16.msra.mxu0 0
  %74 = vmatprep.subr.bf16.mxu0 0
  %75 = vmatpush1.bf16.msra.mxu0 0
  %76 = vmatprep.subr.bf16.mxu0 0
  %77 = vmatpush1.bf16.msra.mxu0 0
  %78 = vmatprep.subr.bf16.mxu0 0
  %79 = vmatpush1.bf16.msra.mxu0 0
  %80 = vmatprep.subr.bf16.mxu0 0
  %81 = vmatpush1.bf16.msra.mxu0 0
  %82 = vmatprep.subr.bf16.mxu0 0
  %83 = vmatpush1.bf16.msra.mxu0 0
  %84 = vmatprep.subr.bf16.mxu0 0
  %85 = vmatpush1.bf16.msra.mxu0 0
  %86 = vmatprep.subr.bf16.mxu0 0
  %87 = vmatpush1.bf16.msra.mxu0 0
  %88 = vmatprep.subr.bf16.mxu0 0
  %89 = vmatpush1.bf16.msra.mxu0 0
  %90 = vmatprep.subr.bf16.mxu0 0
  %91 = vmatpush1.bf16.msra.mxu0 0
  %92 = vmatprep.subr.bf16.mxu0 0
  %93 = vmatpush1.bf16.msra.mxu0 0
  %94 = vmatprep.mubr.bf16.mxu0 0
  %95 = vmatmul.mubr.bf16.gmra.mrb[0].mxu0 %v60
  %v96 = vpop.f32.mrb[0].mxu0
  %v97 = vadd.f32 0.0, %v96
  %v98 = vpop.f32.mrb[0].mxu0
  %v99 = vpop.f32.mrb[0].mxu0
  %v100 = vadd.f32 0.0, %v99
  %v101 = vpop.f32.mrb[0].mxu0
  %102 = vdwg.mxu0
  %v103 = vadd.f32 %v51, %v97
  %v104 = vadd.f32 %v52, %v100
  %105 = vst [vmem:[#allocation2] sm:$0xff] %v103
  %106 = vst [vmem:[#allocation2 + $0x8] sm:$0xff] %v104
  // Predicated region
  $region18: #{forward.16} parent=0 // pred_check
    %p107 = pneg %p15
  $region19: #{forward.16} parent=0 // pred_check_branch
    %109 = sbr.rel (%p107) target = $region21
  $region20: #{forward.16} parent=0 // pred_region
    %v110 = vld [vmem:[#allocation2] sm:$0xff]
    %v111 = vld [vmem:[#allocation2 + $0x8] sm:$0xff]
    %v112 = vld [vmem:[%s2] sm:$0x1]
    %v114 = vlaneseq
    %v115 = vshrl.u32 %v114, 7
    %v116 = vsub.s32 0, %v115
    %v117 = vrot.slane %v112, %v116
    %v119 = vadd.f32 %v110, %v117
    %v120 = vadd.f32 %v111, %v117
    %v121 = vmul.f32 %v119, 0.5
    %v122 = vmul.f32 %v120, 0.5
    %v123 = vmul.f32 %v119, 0.044715
    %v124 = vmul.f32 %v120, 0.044715
    %v125 = vmul.f32 %v123, %v119
    %v126 = vmul.f32 %v124, %v120
    %v127 = vmul.f32 %v125, %v119
    %v128 = vmul.f32 %v126, %v120
    %v129 = vadd.f32 %v119, %v127
    %v130 = vadd.f32 %v120, %v128
    %v131 = vmul.f32 %v129, 0.7978846
    %v132 = vmul.f32 %v130, 0.7978846
    %v133 = vtanh.pop %v131
    %v134 = vtanh.pop %v132
    %v135 = vadd.f32 %v133, 1.0
    %v136 = vadd.f32 %v134, 1.0
    %v137 = vmul.f32 %v121, %v135
    %v138 = vmul.f32 %v122, %v136
    %v139 = vpack.c.bf16 %v138, %v137
    %v141 = vunpack.c.l.b16 %v139
    %v142 = vunpack.c.h.b16 %v139
    %v143 = vpack.c.b16 %v141, %v141
    %v144 = vpack.c.b16 %v142, %v142
    %147 = vst [vmem:[%s3] sm:$0xf] %v143
    %148 = vst [vmem:[%s3 + $0x4] sm:$0xf] %v144
  $region21: #{forward.16} parent=0 // pred_fallthru
    _
  // Predicated region
  $region22: #{forward.16} parent=0 // pred_check
    _
  $region23: #{forward.16} parent=0 // pred_check_branch
    %150 = sbr.rel (0) target = $region25
  $region24: #{forward.16} parent=0 // pred_region
    _
  $region25: #{forward.16} parent=0 // pred_fallthru
    _
  // Predicated region
  $region26: #{forward.16} parent=0 // pred_check
    _
  $region27: #{forward.16} parent=0 // pred_check_branch
    %152 = sbr.rel (0) target = $region29
  $region28: #{forward.16} parent=0 // pred_region
    _
  $region29: #{forward.16} parent=0 // pred_fallthru
    _

// kernel: forward.17
$region0: #{forward.17}
  #allocation0 [shape = 'u32[]', space=smem, size = 0x4, offset = 0x4, fixed_abs, tag = 'smem constant byte address 0x4 - core index']
  #allocation1 [shape = 'u32[144,128]{1,0:T(1,128)}', space=vmem, size = 0x12000, scoped, tag = 'internal scratch']
  #allocation2 [shape = 'f32[16,32]{1,0:T(8,128)}', space=vmem, size = 0x2000, scoped, tag = 'scratch operand']
  %s0 = inlined_call_operand.vmem [shape: bf16[16,128], index: 0, kind: input, shape index: {}]
  %s1 = inlined_call_operand.vmem [shape: s32[4,32], index: 1, kind: input, shape index: {}]
  %s2 = inlined_call_operand.vmem [shape: f32[1,32], index: 2, kind: input, shape index: {}]
  %s3 = inlined_call_operand.vmem [shape: bf16[16,32], index: 3, kind: input, shape index: {}, may-alias: {3,6}]
  %s4 = inlined_call_operand.vmem [shape: f32[1,32], index: 4, kind: input, shape index: {}]
  %s5 = inlined_call_operand.vmem [shape: f32[1,32], index: 5, kind: input, shape index: {}]
  %s6 = inlined_call_operand.vmem [shape: bf16[16,32], index: 6, kind: output, shape index: {0}, may-alias: {3,6}]
  %s7 = inlined_call_operand.vmem [shape: bf16[16,32], index: 7, kind: output, shape index: {1}]
  %8 = xla_tuple %s6, %s7
  %s9 = sld [smem:[#allocation0]]
  $region50: #{forward.17} parent=0
    _
  %s11 = ssub.s32 1, %s9
  %s12 = scalar_select 0, %s11, %s9
  // Predicated region
  $region2: #{forward.17} parent=0 // pred_check
    _
  $region3: #{forward.17} parent=0 // pred_check_branch
    %14 = sbr.rel (0) target = $region5
  $region4: #{forward.17} parent=0 // pred_region
    _
  $region5: #{forward.17} parent=0 // pred_fallthru
    _
  // Predicated region
  $region6: #{forward.17} parent=0 // pred_check
    _
  $region7: #{forward.17} parent=0 // pred_check_branch
    %16 = sbr.rel (0) target = $region9
  $region8: #{forward.17} parent=0 // pred_region
    _
  $region9: #{forward.17} parent=0 // pred_fallthru
    _
  // Predicated region
  $region10: #{forward.17} parent=0 // pred_check
    _
  $region11: #{forward.17} parent=0 // pred_check_branch
    %18 = sbr.rel (0) target = $region13
  $region12: #{forward.17} parent=0 // pred_region
    _
  $region13: #{forward.17} parent=0 // pred_fallthru
    _
  // Predicated region
  $region14: #{forward.17} parent=0 // pred_check
    _
  $region15: #{forward.17} parent=0 // pred_check_branch
    %20 = sbr.rel (0) target = $region17
  $region16: #{forward.17} parent=0 // pred_region
    _
  $region17: #{forward.17} parent=0 // pred_fallthru
    _
  // Predicated region
  $region18: #{forward.17} parent=0 // pred_check
    _
  $region19: #{forward.17} parent=0 // pred_check_branch
    %22 = sbr.rel (0) target = $region21
  $region20: #{forward.17} parent=0 // pred_region
    _
  $region21: #{forward.17} parent=0 // pred_fallthru
    _
  // Predicated region
  $region22: #{forward.17} parent=0 // pred_check
    _
  $region23: #{forward.17} parent=0 // pred_check_branch
    %24 = sbr.rel (0) target = $region25
  $region24: #{forward.17} parent=0 // pred_region
    _
  $region25: #{forward.17} parent=0 // pred_fallthru
    _
  %p26 = scmp.eq.s32.totalorder 0, 0
  // Predicated region
  $region26: #{forward.17} parent=0 // pred_check
    %p27 = pneg %p26
  $region27: #{forward.17} parent=0 // pred_check_branch
    %29 = sbr.rel (%p27) target = $region29
  $region28: #{forward.17} parent=0 // pred_region
    %vm30 = vcmask 261120
    %31 = vst.msk [vmem:[#allocation2] sm:$0xff] %vm30, 0.0
    %32 = vst.msk [vmem:[#allocation2 + $0x8] sm:$0xff] %vm30, 0.0
  $region29: #{forward.17} parent=0 // pred_fallthru
    _
  %v33 = vld [vmem:[%s0] sm:$0xf]
  %v34 = vld [vmem:[%s0 + $0x4] sm:$0xf]
  %v35 = vld [vmem:[%s1] sm:$0xf]
  %v36 = vlaneseq
  %v37 = vshrl.u32 %v36, 7
  %v38 = vadd.s32 %v37, 8
  %v39 = vadd.s32 %v37, 16
  %v40 = vadd.s32 %v37, 24
  %v42 = vunpack.c.l.s4 1966171168
  %v43 = vunpack.c.0.s8 %v42
  %v44 = vlaneseq
  %v45 = vshrl.u32 %v44, 7
  %v46 = vsub.s32 %v43, %v45
  %v47 = vrot.slane %v35, %v46
  %v48 = vcombine.high %v47, %v47
  %v50 = vunpack.c.l.s4 1966171168
  %v51 = vunpack.c.0.s8 %v50
  %v52 = vlaneseq
  %v53 = vshrl.u32 %v52, 7
  %v54 = vsub.s32 %v51, %v53
  %v55 = vrot.slane %v47, %v54
  %v57 = vunpack.c.l.s4 1966171168
  %v58 = vunpack.c.0.s8 %v57
  %v59 = vlaneseq
  %v60 = vshrl.u32 %v59, 7
  %v61 = vsub.s32 %v58, %v60
  %v62 = vrot.slane %v48, %v61
  %v63 = vcombine.high %v55, %v55
  %v64 = vcombine.high %v62, %v62
  %v65 = vlaneseq
  %v66 = vshrl.u32 %v65, 7
  %v67 = vsub.s32 0, %v66
  %v68 = vrot.slane %v55, %v67
  %v69 = vlaneseq
  %v70 = vshrl.u32 %v69, 7
  %v71 = vsub.s32 0, %v70
  %v72 = vrot.slane %v62, %v71
  %v73 = vlaneseq
  %v74 = vshrl.u32 %v73, 7
  %v75 = vsub.s32 0, %v74
  %v76 = vrot.slane %v63, %v75
  %v77 = vlaneseq
  %v78 = vshrl.u32 %v77, 7
  %v79 = vsub.s32 0, %v78
  %v80 = vrot.slane %v64, %v79
  %v81 = vshrl.u32 %v68, %v37
  %v82 = vshrl.u32 %v68, %v38
  %v83 = vshrl.u32 %v68, %v39
  %v84 = vshrl.u32 %v68, %v40
  %v85 = vshrl.u32 %v72, %v37
  %v86 = vshrl.u32 %v72, %v38
  %v87 = vshrl.u32 %v72, %v39
  %v88 = vshrl.u32 %v72, %v40
  %v89 = vshrl.u32 %v76, %v37
  %v90 = vshrl.u32 %v76, %v38
  %v91 = vshrl.u32 %v76, %v39
  %v92 = vshrl.u32 %v76, %v40
  %v93 = vshrl.u32 %v80, %v37
  %v94 = vshrl.u32 %v80, %v38
  %v95 = vshrl.u32 %v80, %v39
  %v96 = vshrl.u32 %v80, %v40
  %v97 = vand.u32 %v81, 1
  %v98 = vand.u32 %v82, 1
  %v99 = vand.u32 %v83, 1
  %v100 = vand.u32 %v84, 1
  %v101 = vand.u32 %v85, 1
  %v102 = vand.u32 %v86, 1
  %v103 = vand.u32 %v87, 1
  %v104 = vand.u32 %v88, 1
  %v105 = vand.u32 %v89, 1
  %v106 = vand.u32 %v90, 1
  %v107 = vand.u32 %v91, 1
  %v108 = vand.u32 %v92, 1
  %v109 = vand.u32 %v93, 1
  %v110 = vand.u32 %v94, 1
  %v111 = vand.u32 %v95, 1
  %v112 = vand.u32 %v96, 1
  %vm113 = vcmp.eq.s32.totalorder %v97, 1
  %vm114 = vcmp.eq.s32.totalorder %v98, 1
  %vm115 = vcmp.eq.s32.totalorder %v99, 1
  %vm116 = vcmp.eq.s32.totalorder %v100, 1
  %vm117 = vcmp.eq.s32.totalorder %v101, 1
  %vm118 = vcmp.eq.s32.totalorder %v102, 1
  %vm119 = vcmp.eq.s32.totalorder %v103, 1
  %vm120 = vcmp.eq.s32.totalorder %v104, 1
  %vm121 = vcmp.eq.s32.totalorder %v105, 1
  %vm122 = vcmp.eq.s32.totalorder %v106, 1
  %vm123 = vcmp.eq.s32.totalorder %v107, 1
  %vm124 = vcmp.eq.s32.totalorder %v108, 1
  %vm125 = vcmp.eq.s32.totalorder %v109, 1
  %vm126 = vcmp.eq.s32.totalorder %v110, 1
  %vm127 = vcmp.eq.s32.totalorder %v111, 1
  %vm128 = vcmp.eq.s32.totalorder %v112, 1
  %v129 = vsel %vm113, 1.0, -1.0
  %v130 = vsel %vm114, 1.0, -1.0
  %v131 = vsel %vm115, 1.0, -1.0
  %v132 = vsel %vm116, 1.0, -1.0
  %v133 = vsel %vm117, 1.0, -1.0
  %v134 = vsel %vm118, 1.0, -1.0
  %v135 = vsel %vm119, 1.0, -1.0
  %v136 = vsel %vm120, 1.0, -1.0
  %v137 = vsel %vm121, 1.0, -1.0
  %v138 = vsel %vm122, 1.0, -1.0
  %v139 = vsel %vm123, 1.0, -1.0
  %v140 = vsel %vm124, 1.0, -1.0
  %v141 = vsel %vm125, 1.0, -1.0
  %v142 = vsel %vm126, 1.0, -1.0
  %v143 = vsel %vm127, 1.0, -1.0
  %v144 = vsel %vm128, 1.0, -1.0
  %v145 = vpack.c.bf16 %v130, %v129
  %v146 = vpack.c.bf16 %v132, %v131
  %v147 = vpack.c.bf16 %v134, %v133
  %v148 = vpack.c.bf16 %v136, %v135
  %v149 = vpack.c.bf16 %v138, %v137
  %v150 = vpack.c.bf16 %v140, %v139
  %v151 = vpack.c.bf16 %v142, %v141
  %v152 = vpack.c.bf16 %v144, %v143
  %v153 = vld [vmem:[#allocation2] sm:$0xff]
  %v154 = vld [vmem:[#allocation2 + $0x8] sm:$0xff]
  %v157 = vunpack.c.l.b16 %v33
  %v158 = vunpack.c.l.b16 %v34
  %v159 = vpack.c.b16 %v158, %v157
  %161 = vmatprep.subr.bf16.mxu0 0
  %162 = vmatpush1.bf16.msra.mxu0 %v145
  %163 = vmatprep.subr.bf16.mxu0 0
  %164 = vmatpush1.bf16.msra.mxu0 %v146
  %165 = vmatprep.subr.bf16.mxu0 0
  %166 = vmatpush1.bf16.msra.mxu0 %v147
  %167 = vmatprep.subr.bf16.mxu0 0
  %168 = vmatpush1.bf16.msra.mxu0 %v148
  %169 = vmatprep.subr.bf16.mxu0 0
  %170 = vmatpush1.bf16.msra.mxu0 %v149
  %171 = vmatprep.subr.bf16.mxu0 0
  %172 = vmatpush1.bf16.msra.mxu0 %v150
  %173 = vmatprep.subr.bf16.mxu0 0
  %174 = vmatpush1.bf16.msra.mxu0 %v151
  %175 = vmatprep.subr.bf16.mxu0 0
  %176 = vmatpush1.bf16.msra.mxu0 %v152
  %177 = vmatprep.subr.bf16.mxu0 0
  %178 = vmatpush1.bf16.msra.mxu0 0
  %179 = vmatprep.subr.bf16.mxu0 0
  %180 = vmatpush1.bf16.msra.mxu0 0
  %181 = vmatprep.subr.bf16.mxu0 0
  %182 = vmatpush1.bf16.msra.mxu0 0
  %183 = vmatprep.subr.bf16.mxu0 0
  %184 = vmatpush1.bf16.msra.mxu0 0
  %185 = vmatprep.subr.bf16.mxu0 0
  %186 = vmatpush1.bf16.msra.mxu0 0
  %187 = vmatprep.subr.bf16.mxu0 0
  %188 = vmatpush1.bf16.msra.mxu0 0
  %189 = vmatprep.subr.bf16.mxu0 0
  %190 = vmatpush1.bf16.msra.mxu0 0
  %191 = vmatprep.subr.bf16.mxu0 0
  %192 = vmatpush1.bf16.msra.mxu0 0
  %193 = vmatprep.mubr.bf16.mxu0 0
  %194 = vmatmul.mubr.bf16.gmra.mrb[0].mxu0 %v159
  %v195 = vpop.f32.mrb[0].mxu0
  %v196 = vadd.f32 0.0, %v195
  %v197 = vpop.f32.mrb[0].mxu0
  %v198 = vpop.f32.mrb[0].mxu0
  %v199 = vadd.f32 0.0, %v198
  %v200 = vpop.f32.mrb[0].mxu0
  %201 = vdwg.mxu0
  %v202 = vadd.f32 %v153, %v196
  %v203 = vadd.f32 %v154, %v199
  %vm204 = vcmask 261120
  %205 = vst.msk [vmem:[#allocation2] sm:$0xff] %vm204, %v202
  %206 = vst.msk [vmem:[#allocation2 + $0x8] sm:$0xff] %vm204, %v203
  // Predicated region
  $region30: #{forward.17} parent=0 // pred_check
    %p207 = pneg %p26
  $region31: #{forward.17} parent=0 // pred_check_branch
    %209 = sbr.rel (%p207) target = $region33
  $region32: #{forward.17} parent=0 // pred_region
    %v210 = vld [vmem:[#allocation2] sm:$0xff]
    %v211 = vld [vmem:[#allocation2 + $0x8] sm:$0xff]
    %v212 = vld [vmem:[%s2] sm:$0x1]
    %v214 = vlaneseq
    %v215 = vshrl.u32 %v214, 7
    %v216 = vsub.s32 0, %v215
    %v217 = vrot.slane %v212, %v216
    %v219 = vadd.f32 %v210, %v217
    %v220 = vadd.f32 %v211, %v217
    %v221 = vld [vmem:[%s3] sm:$0xf]
    %v222 = vld [vmem:[%s3 + $0x4] sm:$0xf]
    %v223 = vunpack.c.l.bf16 %v221
    %v224 = vunpack.c.l.bf16 %v222
    %v225 = vadd.f32 %v219, %v223
    %v226 = vadd.f32 %v220, %v224
    %v227 = vpack.c.bf16 %v226, %v225
    %v229 = vunpack.c.l.b16 %v227
    %v230 = vunpack.c.h.b16 %v227
    %v231 = vpack.c.b16 %v229, %v229
    %v232 = vpack.c.b16 %v230, %v230
    %vm235 = vcmask 257024
    %236 = vst.msk [vmem:[%s6] sm:$0xf] %vm235, %v231
    %237 = vst.msk [vmem:[%s6 + $0x4] sm:$0xf] %vm235, %v232
    %v238 = vsel %vm204, %v225, 0.0
    %239 = vadd.xlane.f32.xlu0 %v238
    %v240 = vpop.xlane.xlu0 %239
    %v241 = vsel %vm204, %v226, 0.0
    %242 = vadd.xlane.f32.xlu0 %v241
    %v243 = vpop.xlane.xlu0 %242
    %v244 = vrcp.pop 32.0
    %v245 = vmul.f32 %v240, %v244
    %v246 = vmul.f32 %v243, %v244
    %v247 = vsub.f32 %v225, %v245
    %v248 = vsub.f32 %v226, %v246
    %v249 = vmul.f32 %v247, %v247
    %v250 = vmul.f32 %v248, %v248
    %v251 = vsel %vm204, %v249, 0.0
    %252 = vadd.xlane.f32.xlu0 %v251
    %v253 = vpop.xlane.xlu0 %252
    %v254 = vsel %vm204, %v250, 0.0
    %255 = vadd.xlane.f32.xlu0 %v254
    %v256 = vpop.xlane.xlu0 %255
    %v257 = vmul.f32 %v253, %v244
    %v258 = vmul.f32 %v256, %v244
    %v259 = vadd.f32 %v257, 1e-05
    %v260 = vadd.f32 %v258, 1e-05
    %v261 = vrsqrt.pop %v259
    %v262 = vrsqrt.pop %v260
    %v263 = vmul.f32 %v247, %v261
    %v264 = vmul.f32 %v248, %v262
    %v265 = vld [vmem:[%s4] sm:$0x1]
    %v267 = vlaneseq
    %v268 = vshrl.u32 %v267, 7
    %v269 = vsub.s32 0, %v268
    %v270 = vrot.slane %v265, %v269
    %v272 = vmul.f32 %v263, %v270
    %v273 = vmul.f32 %v264, %v270
    %v274 = vld [vmem:[%s5] sm:$0x1]
    %v276 = vlaneseq
    %v277 = vshrl.u32 %v276, 7
    %v278 = vsub.s32 0, %v277
    %v279 = vrot.slane %v274, %v278
    %v281 = vadd.f32 %v272, %v279
    %v282 = vadd.f32 %v273, %v279
    %v283 = vpack.c.bf16 %v282, %v281
    %v285 = vunpack.c.l.b16 %v283
    %v286 = vunpack.c.h.b16 %v283
    %v287 = vpack.c.b16 %v285, %v285
    %v288 = vpack.c.b16 %v286, %v286
    %291 = vst.msk [vmem:[%s7] sm:$0xf] %vm235, %v287
    %292 = vst.msk [vmem:[%s7 + $0x4] sm:$0xf] %vm235, %v288
  $region33: #{forward.17} parent=0 // pred_fallthru
    _
  // Predicated region
  $region34: #{forward.17} parent=0 // pred_check
    _
  $region35: #{forward.17} parent=0 // pred_check_branch
    %294 = sbr.rel (0) target = $region37
  $region36: #{forward.17} parent=0 // pred_region
    _
  $region37: #{forward.17} parent=0 // pred_fallthru
    _
  // Predicated region
  $region38: #{forward.17} parent=0 // pred_check
    _
  $region39: #{forward.17} parent=0 // pred_check_branch
    %296 = sbr.rel (0) target = $region41
  $region40: #{forward.17} parent=0 // pred_region
    _
  $region41: #{forward.17} parent=0 // pred_fallthru
    _
  // Predicated region
  $region42: #{forward.17} parent=0 // pred_check
    _
  $region43: #{forward.17} parent=0 // pred_check_branch
    %298 = sbr.rel (0) target = $region45
  $region44: #{forward.17} parent=0 // pred_region
    _
  $region45: #{forward.17} parent=0 // pred_fallthru
    _
  // Predicated region
  $region46: #{forward.17} parent=0 // pred_check
    _
  $region47: #{forward.17} parent=0 // pred_check_branch
    %300 = sbr.rel (0) target = $region49
  $region48: #{forward.17} parent=0 // pred_region
    _
  $region49: #{forward.17} parent=0 // pred_fallthru
    _

</llo_original>
